<compile_context>
chip_gen: v6e
topology: v6e:2x2x1
jax: 0.10.0
libtpu: 0.0.40
codegen_flags: <defaults>
</compile_context>

<pallas_src>
import functools
import math

import jax
import jax.numpy as jnp
from jax import lax
from jax.experimental import pallas as pl
from jax.experimental.pallas import tpu as pltpu


# --------------------------------------------------------------------------- #
# Kernel
# --------------------------------------------------------------------------- #
def _downsample_kernel(planes_ref, w_ref, b_ref, o_ref, *, TH, MC, Wo, C):
    """One grid step == one (batch image, output-row tile).

    planes_ref : (4, TH+1, Wo+1, C)  phase planes, phase = 2*(row par) + (col par)
                 planes[phase, q, j, c] = x_pad[2*(tile*TH+q) + p, 2*j + pw, c]
    w_ref      : (3, 3, C, C)        conv weight, HWIO layout
    b_ref      : (1, C)              bias (f32)
    o_ref      : (TH, Wo, C)         output tile
    """
    n_chunks = TH // MC
    for ci in range(n_chunks):                       # static -> straight-line code
        m0 = ci * MC
        acc = jnp.zeros((MC * Wo, C), dtype=jnp.float32)
        for kh in range(3):
            q0 = m0 + (kh // 2)                      # row-group offset of this tap
            p = kh % 2                               # row parity
            for kw in range(3):
                pw = kw % 2                          # column parity
                dw = kw // 2                         # column offset inside plane
                # Contiguous (unstrided) slab -> full vld bandwidth, no gathers.
                patch = planes_ref[2 * p + pw, q0:q0 + MC, dw:dw + Wo, :]
                acc = acc + jnp.dot(patch.reshape(MC * Wo, C), w_ref[kh, kw],
                                    preferred_element_type=jnp.float32)
        acc = acc + b_ref[...].astype(jnp.float32)
        # Chunk goes straight to the output block; accumulator never grows
        # beyond (MC*Wo, C) f32 (kept <= ~128 KiB by the MC choice).
        o_ref[m0:m0 + MC, :, :] = acc.reshape(MC, Wo, C).astype(o_ref.dtype)


# --------------------------------------------------------------------------- #
# Tiling / spec construction
# --------------------------------------------------------------------------- #
def _vmem_capacity_bytes():
    try:
        return int(pltpu.get_tpu_info().vmem_capacity_bytes)
    except Exception:
        return 64 << 20          # conservative: assume v7x-sized VMEM per core


def _select_tiles(B, Ho, Wo, C, in_itemsize, out_itemsize, const_bytes):
    """Pick (TH rows per tile, MC rows per accumulator chunk, n_h row tiles)."""
    Wo1 = Wo + 1

    # (1) accumulator chunk: MC*Wo*C*4 bytes must stay comfortably in vregs.
    mc_cap = max(1, (128 * 1024) // max(4 * Wo * C, 1))

    # (2) parallelism: aim for >= 4 grid blocks in total (2 TCs on v7x + enough
    #     steps to hide the pipeline ramp on every generation).
    min_row_blocks = max(1, -(-4 // B))
    th_par_cap = max(1, -(-Ho // min_row_blocks))

    MC = max(1, min(mc_cap, 32, Ho, th_par_cap))

    # (3) generation-aware VMEM budget for the double-buffered working set
    #     (~38 MiB on 128 MiB v5e/v6e, ~19 MiB on 64 MiB v7x).
    vmem_cap = _vmem_capacity_bytes()
    budget = max(8 << 20, min(int(vmem_cap * 0.30), 40 << 20)) - const_bytes
    budget = max(budget, 4 << 20)

    def step_bytes(th):
        planes_blk = 4 * (th + 1) * Wo1 * C * in_itemsize
        out_blk = th * Wo * C * out_itemsize
        return 2 * (planes_blk + out_blk)            # double-buffered blocks

    # TH: largest multiple of MC under the parallelism cap and VMEM budget.
    # (no divisibility requirement on Ho; 32-chunk cap bounds unrolled code size)
    th_cap = min(-(-Ho // MC) * MC, max(MC, (th_par_cap // MC) * MC), 32 * MC)
    TH = MC
    th = 2 * MC
    while th <= th_cap and step_bytes(th) <= budget:
        TH = th
        th += MC

    n_h = -(-Ho // TH)
    return TH, MC, n_h, vmem_cap


def _const_spec(shape, single_buffer):
    """BlockSpec for a grid-invariant operand (constant index_map => one DMA)."""
    index_map = lambda b, i: (0,) * len(shape)
    if single_buffer and hasattr(pl, "Buffered"):
        try:
            # Single VMEM copy for the constants; frees VMEM for activations.
            return pl.BlockSpec(shape, index_map, pipeline_mode=pl.Buffered(1))
        except TypeError:        # constructor-level check only (safe under jit)
            pass
    return pl.BlockSpec(shape, index_map)


def _build_call(B, Ho, Wo, C, TH, MC, n_h, vmem_cap, compute_dtype, out_dtype,
                const_bytes, single_buffer_consts, allow_input_fusion):
    Wo1 = Wo + 1
    in_it = jnp.dtype(compute_dtype).itemsize
    out_it = jnp.dtype(out_dtype).itemsize
    kernel = functools.partial(_downsample_kernel, TH=TH, MC=MC, Wo=Wo, C=C)

    planes_blk = 4 * (TH + 1) * Wo1 * C * in_it
    out_blk = TH * Wo * C * out_it
    working = 2 * (planes_blk + out_blk) + const_bytes
    upper = max(32 << 20, int(vmem_cap * 0.85))      # <= ~54 MiB on v7x
    vmem_limit = int(min(max(working + (8 << 20), 16 << 20), upper))

    params = dict(dimension_semantics=("parallel", "parallel"),
                  vmem_limit_bytes=vmem_limit)
    if allow_input_fusion:
        # Lets XLA fuse the pad/split/regroup staging into the input DMA of the
        # pallas_call (removes the staged-plane HBM round trip when it applies).
        params["allow_input_fusion"] = [0]

    return pl.pallas_call(
        kernel,
        out_shape=jax.ShapeDtypeStruct((B, Ho, Wo, C), out_dtype),
        grid_spec=pltpu.PrefetchScalarGridSpec(
            num_scalar_prefetch=0,
            grid=(B, n_h),
            in_specs=[
                pl.BlockSpec((pl.Squeezed(), pl.Squeezed(), 4, TH + 1, Wo1, C),
                             lambda b, i: (b, i, 0, 0, 0, 0)),
                _const_spec((3, 3, C, C), single_buffer_consts),
                _const_spec((1, C), single_buffer_consts),
            ],
            out_specs=pl.BlockSpec((pl.Squeezed(), TH, Wo, C),
                                   lambda b, i: (b, i, 0, 0)),
        ),
        compiler_params=pltpu.CompilerParams(**params),
    )


# --------------------------------------------------------------------------- #
# Forward wrappers
# --------------------------------------------------------------------------- #
def downsample_forward_nhwc(x_nhwc, w_oihw, bias, temb=None, *,
                            compute_in_bf16=None,
                            single_buffer_consts=False,
                            allow_input_fusion=False):
    """DownSample forward, NHWC layout (preferred entry: no layout transposes)."""
    del temb                                   # unused, mirrors the PyTorch forward
    B, H, W, C = x_nhwc.shape
    assert w_oihw.shape == (C, C, 3, 3), w_oihw.shape
    assert bias.shape == (C,), bias.shape
    Ho = (H + 1) // 2
    Wo = (W + 1) // 2
    Wo1 = Wo + 1

    out_dtype = x_nhwc.dtype
    if compute_in_bf16 is None:
        compute_in_bf16 = (x_nhwc.dtype == jnp.bfloat16)
    compute_dtype = jnp.bfloat16 if compute_in_bf16 else jnp.float32
    in_it = jnp.dtype(compute_dtype).itemsize
    out_it = jnp.dtype(out_dtype).itemsize

    const_copies = 1 if single_buffer_consts else 2
    const_bytes = const_copies * 9 * C * C * in_it + 2 * 4 * C
    TH, MC, n_h, vmem_cap = _select_tiles(B, Ho, Wo, C, in_it, out_it, const_bytes)
    assert TH % MC == 0

    # ---- Staging (one XLA fusion): pad once, split every padded element into
    # exactly one of 4 (row-parity x column-parity) phase planes, then regroup
    # into per-row-tile blocks with a single duplicated halo row-group per tile.
    # Total staged bytes ~= (1 + 1/TH) * |x_pad|  (vs. 1.5x for a row-phase split).
    Qrows = n_h * TH + 1
    Hp = 2 * Qrows
    Wp = 2 * Wo + 2
    x_pad = jnp.pad(x_nhwc, ((0, 0), (1, Hp - H - 1), (1, Wp - W - 1), (0, 0)))
    xc = jnp.stack([x_pad[:, :, 0::2, :], x_pad[:, :, 1::2, :]],
                   axis=1)                               # (B, pw, Hp, Wo1, C)
    g = xc.reshape(B, 2, Qrows, 2, Wo1, C)               # (B, pw, q, p, j, c)
    g = g.transpose(0, 3, 1, 2, 4, 5)                    # (B, p, pw, q, j, c)
    g = g.reshape(B, 4, Qrows, Wo1, C)                   # phase = 2*p + pw
    planes = jnp.stack([g[:, :, i * TH:i * TH + TH + 1] for i in range(n_h)],
                       axis=1).astype(compute_dtype)     # (B, n_h, 4, TH+1, Wo1, C)

    w_hwio = jnp.transpose(w_oihw, (2, 3, 1, 0)).astype(compute_dtype)  # (3,3,Ci,Co)
    b2 = bias.astype(jnp.float32).reshape(1, C)

    call = _build_call(B, Ho, Wo, C, TH, MC, n_h, vmem_cap, compute_dtype,
                       out_dtype, const_bytes, single_buffer_consts,
                       allow_input_fusion)
    return call(planes, w_hwio, b2)


def downsample_forward(x_nchw, w_oihw, bias, temb=None, **kwargs):
    """PyTorch-layout entry point (NCHW in / NCHW out).

    NOTE: if the surrounding model can carry NHWC activations, call
    `downsample_forward_nhwc` directly: the output transpose here is a full
    extra HBM round trip (the input transpose fuses into the staging pass).
    """
    x_nhwc = jnp.transpose(x_nchw, (0, 2, 3, 1))
    y_nhwc = downsample_forward_nhwc(x_nhwc, w_oihw, bias, temb, **kwargs)
    return jnp.transpose(y_nhwc, (0, 3, 1, 2))


def init_downsample_params(key, in_ch):
    """Xavier-uniform weight (OIHW, like PyTorch) + zero bias."""
    fan_in = in_ch * 3 * 3
    fan_out = in_ch * 3 * 3
    bound = math.sqrt(6.0 / (fan_in + fan_out))
    w = jax.random.uniform(key, (in_ch, in_ch, 3, 3),
                           minval=-bound, maxval=bound, dtype=jnp.float32)
    b = jnp.zeros((in_ch,), dtype=jnp.float32)
    return w, b


def _conv_ref(x, w, b):
    y = lax.conv_general_dilated(
        x, w, window_strides=(2, 2), padding=((1, 1), (1, 1)),
        dimension_numbers=("NCHW", "OIHW", "NCHW"),
        precision=lax.Precision.HIGHEST)
    return y + b[None, :, None, None]


# --------------------------------------------------------------------------- #
# Self-test
# --------------------------------------------------------------------------- #
if __name__ == "__main__":
    key = jax.random.PRNGKey(0)
    k_x, k_w, k_t, k_x2, k_w2, k_b2 = jax.random.split(key, 6)

    # Case 1: even spatial dims (module-default demo shape).
    B, C, H, W = 2, 4, 16, 16
    x = jax.random.normal(k_x, (B, C, H, W), dtype=jnp.float32)
    temb = jax.random.normal(k_t, (B, 32), dtype=jnp.float32)  # ignored by forward
    w, b = init_downsample_params(k_w, C)

    y = jax.block_until_ready(downsample_forward(x, w, b, temb))
    y_ref = jax.block_until_ready(_conv_ref(x, w, b))
    assert y.shape == (B, C, H // 2, W // 2), y.shape
    assert jnp.allclose(y, y_ref, rtol=1e-4, atol=1e-4), "mismatch vs lax.conv (even)"

    # Case 2: odd spatial dims + odd channels + nonzero bias + partial row tiles.
    B2, C2, H2, W2 = 1, 3, 9, 7
    x2 = jax.random.normal(k_x2, (B2, C2, H2, W2), dtype=jnp.float32)
    w2, _ = init_downsample_params(k_w2, C2)
    b2 = 0.1 * jax.random.normal(k_b2, (C2,), dtype=jnp.float32)

    y2 = jax.block_until_ready(downsample_forward(x2, w2, b2, None))
    y2_ref = jax.block_until_ready(_conv_ref(x2, w2, b2))
    assert y2.shape == (B2, C2, (H2 + 1) // 2, (W2 + 1) // 2), y2.shape
    assert jnp.allclose(y2, y2_ref, rtol=1e-4, atol=1e-4), "mismatch vs lax.conv (odd)"

    # Case 3: bf16 staging path (f32 in/out, bf16 MXU operands, f32 accumulation).
    x_nhwc = jnp.transpose(x, (0, 2, 3, 1))
    y3 = jax.block_until_ready(
        jnp.transpose(downsample_forward_nhwc(x_nhwc, w, b, compute_in_bf16=True),
                      (0, 3, 1, 2)))
    assert y3.shape == y_ref.shape, y3.shape
    assert jnp.allclose(y3, y_ref, rtol=5e-2, atol=5e-2), "mismatch (bf16 staging)"

    print("KERNEL_OK")
</pallas_src>

<mosaic_0001>
module attributes {stable_mosaic.version = 11 : i64} {
  func.func @_downsample_kernel(%arg0: i32, %arg1: i32, %arg2: memref<1x1x4x5x9x4xf32, #tpu.memory_space<vmem>>, %arg3: memref<3x3x4x4xf32, #tpu.memory_space<vmem>>, %arg4: memref<1x4xf32, #tpu.memory_space<vmem>>, %arg5: memref<1x4x8x4xf32, #tpu.memory_space<vmem>>) attributes {dimension_semantics = [#tpu.dimension_semantics<parallel>, #tpu.dimension_semantics<parallel>], iteration_bounds = array<i64: 2, 2>, scalar_prefetch = 0 : i64, scratch_operands = 0 : i64, tpu.core_type = #tpu.core_type<tc>, window_params = [{transform_indices = @transform_0, window_bounds = array<i64: 1, 1, 4, 5, 9, 4>}, {pipeline_mode = #tpu.pipeline_mode<synchronous>, transform_indices = @transform_1, window_bounds = array<i64: 3, 3, 4, 4>}, {pipeline_mode = #tpu.pipeline_mode<synchronous>, transform_indices = @transform_2, window_bounds = array<i64: 1, 4>}, {transform_indices = @transform_3, window_bounds = array<i64: 1, 4, 8, 4>}]} {
    %cst = arith.constant 0.000000e+00 : f32
    %0 = vector.broadcast %cst : f32 to vector<32x4xf32>
    %c0 = arith.constant 0 : index
    %c0_0 = arith.constant 0 : index
    %c0_1 = arith.constant 0 : index
    %c0_2 = arith.constant 0 : index
    %c0_3 = arith.constant 0 : index
    %c0_4 = arith.constant 0 : index
    %1 = vector.load %arg2[%c0, %c0_0, %c0_1, %c0_2, %c0_3, %c0_4] : memref<1x1x4x5x9x4xf32, #tpu.memory_space<vmem>>, vector<1x1x1x4x8x4xf32>
    %2 = vector.shape_cast %1 : vector<1x1x1x4x8x4xf32> to vector<4x8x4xf32>
    %3 = vector.shape_cast %2 : vector<4x8x4xf32> to vector<32x4xf32>
    %c0_5 = arith.constant 0 : index
    %c0_6 = arith.constant 0 : index
    %c0_7 = arith.constant 0 : index
    %c0_8 = arith.constant 0 : index
    %4 = vector.load %arg3[%c0_5, %c0_6, %c0_7, %c0_8] : memref<3x3x4x4xf32, #tpu.memory_space<vmem>>, vector<1x1x4x4xf32>
    %5 = vector.shape_cast %4 : vector<1x1x4x4xf32> to vector<4x4xf32>
    %cst_9 = arith.constant dense<0.000000e+00> : vector<32x4xf32>
    %6 = tpu.matmul %3, %5, %cst_9 {dimension_numbers = #tpu.dot_dimension_numbers<[1], [0], [0], [1], [0, 0, 1, 1], [], []>} : vector<32x4xf32>, vector<4x4xf32>, vector<32x4xf32> -> vector<32x4xf32>
    %7 = arith.addf %0, %6 : vector<32x4xf32>
    %c0_10 = arith.constant 0 : index
    %c0_11 = arith.constant 0 : index
    %c1 = arith.constant 1 : index
    %c0_12 = arith.constant 0 : index
    %c0_13 = arith.constant 0 : index
    %c0_14 = arith.constant 0 : index
    %8 = vector.load %arg2[%c0_10, %c0_11, %c1, %c0_12, %c0_13, %c0_14] : memref<1x1x4x5x9x4xf32, #tpu.memory_space<vmem>>, vector<1x1x1x4x8x4xf32>
    %9 = vector.shape_cast %8 : vector<1x1x1x4x8x4xf32> to vector<4x8x4xf32>
    %10 = vector.shape_cast %9 : vector<4x8x4xf32> to vector<32x4xf32>
    %c0_15 = arith.constant 0 : index
    %c1_16 = arith.constant 1 : index
    %c0_17 = arith.constant 0 : index
    %c0_18 = arith.constant 0 : index
    %11 = vector.load %arg3[%c0_15, %c1_16, %c0_17, %c0_18] : memref<3x3x4x4xf32, #tpu.memory_space<vmem>>, vector<1x1x4x4xf32>
    %12 = vector.shape_cast %11 : vector<1x1x4x4xf32> to vector<4x4xf32>
    %cst_19 = arith.constant dense<0.000000e+00> : vector<32x4xf32>
    %13 = tpu.matmul %10, %12, %cst_19 {dimension_numbers = #tpu.dot_dimension_numbers<[1], [0], [0], [1], [0, 0, 1, 1], [], []>} : vector<32x4xf32>, vector<4x4xf32>, vector<32x4xf32> -> vector<32x4xf32>
    %14 = arith.addf %7, %13 : vector<32x4xf32>
    %c0_20 = arith.constant 0 : index
    %c0_21 = arith.constant 0 : index
    %c0_22 = arith.constant 0 : index
    %c0_23 = arith.constant 0 : index
    %c1_24 = arith.constant 1 : index
    %c0_25 = arith.constant 0 : index
    %15 = vector.load %arg2[%c0_20, %c0_21, %c0_22, %c0_23, %c1_24, %c0_25] : memref<1x1x4x5x9x4xf32, #tpu.memory_space<vmem>>, vector<1x1x1x4x8x4xf32>
    %16 = vector.shape_cast %15 : vector<1x1x1x4x8x4xf32> to vector<4x8x4xf32>
    %17 = vector.shape_cast %16 : vector<4x8x4xf32> to vector<32x4xf32>
    %c0_26 = arith.constant 0 : index
    %c2 = arith.constant 2 : index
    %c0_27 = arith.constant 0 : index
    %c0_28 = arith.constant 0 : index
    %18 = vector.load %arg3[%c0_26, %c2, %c0_27, %c0_28] : memref<3x3x4x4xf32, #tpu.memory_space<vmem>>, vector<1x1x4x4xf32>
    %19 = vector.shape_cast %18 : vector<1x1x4x4xf32> to vector<4x4xf32>
    %cst_29 = arith.constant dense<0.000000e+00> : vector<32x4xf32>
    %20 = tpu.matmul %17, %19, %cst_29 {dimension_numbers = #tpu.dot_dimension_numbers<[1], [0], [0], [1], [0, 0, 1, 1], [], []>} : vector<32x4xf32>, vector<4x4xf32>, vector<32x4xf32> -> vector<32x4xf32>
    %21 = arith.addf %14, %20 : vector<32x4xf32>
    %c0_30 = arith.constant 0 : index
    %c0_31 = arith.constant 0 : index
    %c2_32 = arith.constant 2 : index
    %c0_33 = arith.constant 0 : index
    %c0_34 = arith.constant 0 : index
    %c0_35 = arith.constant 0 : index
    %22 = vector.load %arg2[%c0_30, %c0_31, %c2_32, %c0_33, %c0_34, %c0_35] : memref<1x1x4x5x9x4xf32, #tpu.memory_space<vmem>>, vector<1x1x1x4x8x4xf32>
    %23 = vector.shape_cast %22 : vector<1x1x1x4x8x4xf32> to vector<4x8x4xf32>
    %24 = vector.shape_cast %23 : vector<4x8x4xf32> to vector<32x4xf32>
    %c1_36 = arith.constant 1 : index
    %c0_37 = arith.constant 0 : index
    %c0_38 = arith.constant 0 : index
    %c0_39 = arith.constant 0 : index
    %25 = vector.load %arg3[%c1_36, %c0_37, %c0_38, %c0_39] : memref<3x3x4x4xf32, #tpu.memory_space<vmem>>, vector<1x1x4x4xf32>
    %26 = vector.shape_cast %25 : vector<1x1x4x4xf32> to vector<4x4xf32>
    %cst_40 = arith.constant dense<0.000000e+00> : vector<32x4xf32>
    %27 = tpu.matmul %24, %26, %cst_40 {dimension_numbers = #tpu.dot_dimension_numbers<[1], [0], [0], [1], [0, 0, 1, 1], [], []>} : vector<32x4xf32>, vector<4x4xf32>, vector<32x4xf32> -> vector<32x4xf32>
    %28 = arith.addf %21, %27 : vector<32x4xf32>
    %c0_41 = arith.constant 0 : index
    %c0_42 = arith.constant 0 : index
    %c3 = arith.constant 3 : index
    %c0_43 = arith.constant 0 : index
    %c0_44 = arith.constant 0 : index
    %c0_45 = arith.constant 0 : index
    %29 = vector.load %arg2[%c0_41, %c0_42, %c3, %c0_43, %c0_44, %c0_45] : memref<1x1x4x5x9x4xf32, #tpu.memory_space<vmem>>, vector<1x1x1x4x8x4xf32>
    %30 = vector.shape_cast %29 : vector<1x1x1x4x8x4xf32> to vector<4x8x4xf32>
    %31 = vector.shape_cast %30 : vector<4x8x4xf32> to vector<32x4xf32>
    %c1_46 = arith.constant 1 : index
    %c1_47 = arith.constant 1 : index
    %c0_48 = arith.constant 0 : index
    %c0_49 = arith.constant 0 : index
    %32 = vector.load %arg3[%c1_46, %c1_47, %c0_48, %c0_49] : memref<3x3x4x4xf32, #tpu.memory_space<vmem>>, vector<1x1x4x4xf32>
    %33 = vector.shape_cast %32 : vector<1x1x4x4xf32> to vector<4x4xf32>
    %cst_50 = arith.constant dense<0.000000e+00> : vector<32x4xf32>
    %34 = tpu.matmul %31, %33, %cst_50 {dimension_numbers = #tpu.dot_dimension_numbers<[1], [0], [0], [1], [0, 0, 1, 1], [], []>} : vector<32x4xf32>, vector<4x4xf32>, vector<32x4xf32> -> vector<32x4xf32>
    %35 = arith.addf %28, %34 : vector<32x4xf32>
    %c0_51 = arith.constant 0 : index
    %c0_52 = arith.constant 0 : index
    %c2_53 = arith.constant 2 : index
    %c0_54 = arith.constant 0 : index
    %c1_55 = arith.constant 1 : index
    %c0_56 = arith.constant 0 : index
    %36 = vector.load %arg2[%c0_51, %c0_52, %c2_53, %c0_54, %c1_55, %c0_56] : memref<1x1x4x5x9x4xf32, #tpu.memory_space<vmem>>, vector<1x1x1x4x8x4xf32>
    %37 = vector.shape_cast %36 : vector<1x1x1x4x8x4xf32> to vector<4x8x4xf32>
    %38 = vector.shape_cast %37 : vector<4x8x4xf32> to vector<32x4xf32>
    %c1_57 = arith.constant 1 : index
    %c2_58 = arith.constant 2 : index
    %c0_59 = arith.constant 0 : index
    %c0_60 = arith.constant 0 : index
    %39 = vector.load %arg3[%c1_57, %c2_58, %c0_59, %c0_60] : memref<3x3x4x4xf32, #tpu.memory_space<vmem>>, vector<1x1x4x4xf32>
    %40 = vector.shape_cast %39 : vector<1x1x4x4xf32> to vector<4x4xf32>
    %cst_61 = arith.constant dense<0.000000e+00> : vector<32x4xf32>
    %41 = tpu.matmul %38, %40, %cst_61 {dimension_numbers = #tpu.dot_dimension_numbers<[1], [0], [0], [1], [0, 0, 1, 1], [], []>} : vector<32x4xf32>, vector<4x4xf32>, vector<32x4xf32> -> vector<32x4xf32>
    %42 = arith.addf %35, %41 : vector<32x4xf32>
    %c0_62 = arith.constant 0 : index
    %c0_63 = arith.constant 0 : index
    %c0_64 = arith.constant 0 : index
    %c1_65 = arith.constant 1 : index
    %c0_66 = arith.constant 0 : index
    %c0_67 = arith.constant 0 : index
    %43 = vector.load %arg2[%c0_62, %c0_63, %c0_64, %c1_65, %c0_66, %c0_67] : memref<1x1x4x5x9x4xf32, #tpu.memory_space<vmem>>, vector<1x1x1x4x8x4xf32>
    %44 = vector.shape_cast %43 : vector<1x1x1x4x8x4xf32> to vector<4x8x4xf32>
    %45 = vector.shape_cast %44 : vector<4x8x4xf32> to vector<32x4xf32>
    %c2_68 = arith.constant 2 : index
    %c0_69 = arith.constant 0 : index
    %c0_70 = arith.constant 0 : index
    %c0_71 = arith.constant 0 : index
    %46 = vector.load %arg3[%c2_68, %c0_69, %c0_70, %c0_71] : memref<3x3x4x4xf32, #tpu.memory_space<vmem>>, vector<1x1x4x4xf32>
    %47 = vector.shape_cast %46 : vector<1x1x4x4xf32> to vector<4x4xf32>
    %cst_72 = arith.constant dense<0.000000e+00> : vector<32x4xf32>
    %48 = tpu.matmul %45, %47, %cst_72 {dimension_numbers = #tpu.dot_dimension_numbers<[1], [0], [0], [1], [0, 0, 1, 1], [], []>} : vector<32x4xf32>, vector<4x4xf32>, vector<32x4xf32> -> vector<32x4xf32>
    %49 = arith.addf %42, %48 : vector<32x4xf32>
    %c0_73 = arith.constant 0 : index
    %c0_74 = arith.constant 0 : index
    %c1_75 = arith.constant 1 : index
    %c1_76 = arith.constant 1 : index
    %c0_77 = arith.constant 0 : index
    %c0_78 = arith.constant 0 : index
    %50 = vector.load %arg2[%c0_73, %c0_74, %c1_75, %c1_76, %c0_77, %c0_78] : memref<1x1x4x5x9x4xf32, #tpu.memory_space<vmem>>, vector<1x1x1x4x8x4xf32>
    %51 = vector.shape_cast %50 : vector<1x1x1x4x8x4xf32> to vector<4x8x4xf32>
    %52 = vector.shape_cast %51 : vector<4x8x4xf32> to vector<32x4xf32>
    %c2_79 = arith.constant 2 : index
    %c1_80 = arith.constant 1 : index
    %c0_81 = arith.constant 0 : index
    %c0_82 = arith.constant 0 : index
    %53 = vector.load %arg3[%c2_79, %c1_80, %c0_81, %c0_82] : memref<3x3x4x4xf32, #tpu.memory_space<vmem>>, vector<1x1x4x4xf32>
    %54 = vector.shape_cast %53 : vector<1x1x4x4xf32> to vector<4x4xf32>
    %cst_83 = arith.constant dense<0.000000e+00> : vector<32x4xf32>
    %55 = tpu.matmul %52, %54, %cst_83 {dimension_numbers = #tpu.dot_dimension_numbers<[1], [0], [0], [1], [0, 0, 1, 1], [], []>} : vector<32x4xf32>, vector<4x4xf32>, vector<32x4xf32> -> vector<32x4xf32>
    %56 = arith.addf %49, %55 : vector<32x4xf32>
    %c0_84 = arith.constant 0 : index
    %c0_85 = arith.constant 0 : index
    %c0_86 = arith.constant 0 : index
    %c1_87 = arith.constant 1 : index
    %c1_88 = arith.constant 1 : index
    %c0_89 = arith.constant 0 : index
    %57 = vector.load %arg2[%c0_84, %c0_85, %c0_86, %c1_87, %c1_88, %c0_89] : memref<1x1x4x5x9x4xf32, #tpu.memory_space<vmem>>, vector<1x1x1x4x8x4xf32>
    %58 = vector.shape_cast %57 : vector<1x1x1x4x8x4xf32> to vector<4x8x4xf32>
    %59 = vector.shape_cast %58 : vector<4x8x4xf32> to vector<32x4xf32>
    %c2_90 = arith.constant 2 : index
    %c2_91 = arith.constant 2 : index
    %c0_92 = arith.constant 0 : index
    %c0_93 = arith.constant 0 : index
    %60 = vector.load %arg3[%c2_90, %c2_91, %c0_92, %c0_93] : memref<3x3x4x4xf32, #tpu.memory_space<vmem>>, vector<1x1x4x4xf32>
    %61 = vector.shape_cast %60 : vector<1x1x4x4xf32> to vector<4x4xf32>
    %cst_94 = arith.constant dense<0.000000e+00> : vector<32x4xf32>
    %62 = tpu.matmul %59, %61, %cst_94 {dimension_numbers = #tpu.dot_dimension_numbers<[1], [0], [0], [1], [0, 0, 1, 1], [], []>} : vector<32x4xf32>, vector<4x4xf32>, vector<32x4xf32> -> vector<32x4xf32>
    %63 = arith.addf %56, %62 : vector<32x4xf32>
    %c0_95 = arith.constant 0 : index
    %c0_96 = arith.constant 0 : index
    %64 = vector.load %arg4[%c0_95, %c0_96] : memref<1x4xf32, #tpu.memory_space<vmem>>, vector<1x4xf32>
    %65 = vector.broadcast %64 : vector<1x4xf32> to vector<32x4xf32>
    %66 = arith.addf %63, %65 : vector<32x4xf32>
    %67 = vector.shape_cast %66 : vector<32x4xf32> to vector<4x8x4xf32>
    %c0_97 = arith.constant 0 : index
    %c0_98 = arith.constant 0 : index
    %c0_99 = arith.constant 0 : index
    %c0_100 = arith.constant 0 : index
    %68 = vector.load %arg5[%c0_97, %c0_98, %c0_99, %c0_100] : memref<1x4x8x4xf32, #tpu.memory_space<vmem>>, vector<1x4x8x4xf32>
    %69 = vector.shape_cast %68 : vector<1x4x8x4xf32> to vector<4x8x4xf32>
    %70 = vector.shape_cast %67 : vector<4x8x4xf32> to vector<1x4x8x4xf32>
    tpu.vector_store %arg5[%c0_97, %c0_98, %c0_99, %c0_100], %70 {strides = array<i32>} : memref<1x4x8x4xf32, #tpu.memory_space<vmem>>, vector<1x4x8x4xf32>,
    return
  }
  func.func @transform_0(%arg0: i32, %arg1: i32) -> (i32, i32, i32, i32, i32, i32) {
    %c0_i32 = arith.constant 0 : i32
    %c0_i32_0 = arith.constant 0 : i32
    %c0_i32_1 = arith.constant 0 : i32
    %c0_i32_2 = arith.constant 0 : i32
    %c0_i32_3 = arith.constant 0 : i32
    return %arg0, %arg1, %c0_i32, %c0_i32_0, %c0_i32_1, %c0_i32_2 : i32, i32, i32, i32, i32, i32
  }
  func.func @transform_1(%arg0: i32, %arg1: i32) -> (i32, i32, i32, i32) {
    %c0_i32 = arith.constant 0 : i32
    %c0_i32_0 = arith.constant 0 : i32
    %c0_i32_1 = arith.constant 0 : i32
    %c0_i32_2 = arith.constant 0 : i32
    %c0_i32_3 = arith.constant 0 : i32
    return %c0_i32, %c0_i32_0, %c0_i32_1, %c0_i32_2 : i32, i32, i32, i32
  }
  func.func @transform_2(%arg0: i32, %arg1: i32) -> (i32, i32) {
    %c0_i32 = arith.constant 0 : i32
    %c0_i32_0 = arith.constant 0 : i32
    %c0_i32_1 = arith.constant 0 : i32
    return %c0_i32, %c0_i32_0 : i32, i32
  }
  func.func @transform_3(%arg0: i32, %arg1: i32) -> (i32, i32, i32, i32) {
    %c0_i32 = arith.constant 0 : i32
    %c0_i32_0 = arith.constant 0 : i32
    %c0_i32_1 = arith.constant 0 : i32
    return %arg0, %arg1, %c0_i32, %c0_i32_0 : i32, i32, i32, i32
  }
}

</mosaic_0001>

<llo_original>
// kernel: tpu_custom_call.1
$region0: #{tpu_custom_call.1}
  #allocation0 [shape = 'u32[]', space=smem, size = 0x4, offset = 0x4, fixed_abs, tag = 'smem constant byte address 0x4 - core index']
  #allocation1 [shape = 'u32[144,128]{1,0:T(1,128)}', space=vmem, size = 0x12000, scoped, tag = 'internal scratch']
  %s0 = inlined_call_operand.vmem [shape: f32[2,2,4,5,9,4], index: 0, kind: input, shape index: {}]
  %s1 = inlined_call_operand.vmem [shape: f32[3,3,4,4], index: 1, kind: input, shape index: {}]
  %s2 = inlined_call_operand.vmem [shape: f32[1,4], index: 2, kind: input, shape index: {}]
  %s3 = inlined_call_operand.vmem [shape: f32[2,8,8,4], index: 3, kind: output, shape index: {}]
  %s4 = sld [smem:[#allocation0]]
  $region45: #{tpu_custom_call.1} parent=0
    _
  %s6 = ssub.s32 1, %s4
  %s7 = scalar_select 0, %s6, %s4
  loop: start=0, step=1, limit=6
  $region2: #{tpu_custom_call.1} parent=0 // loop_pre_header
    _
  $region3: #{tpu_custom_call.1} parent=0 // loop_header
    %s9 = sphi 0, %s13
    %p10 = scmp.ge.s32.totalorder %s9, 6
    %s16 = sphi 0, %s28
    %s17 = sphi 0, %s24
    %s18 = sphi 0, %s16
    %s19 = sphi 0, %s17
    %s20 = sphi 0, %s18
    %s21 = sphi 0, %s19
    %s33 = sphi 0, %s35
    %s36 = sphi 0, %s33
    %s37 = sphi 0, %s36
    %s53 = sphi 0, %s37
    %s57 = sphi 0, %s57
    %s59 = sphi 0, %s57
    %s60 = sphi 0, %s59
    %s74 = sphi 0, %s60
    %s78 = sphi 0, %s78
    %s80 = sphi 0, %s78
    %s81 = sphi 0, %s80
    %s95 = sphi 0, %s81
    %s103 = sphi 0, %s105
    %s106 = sphi 0, %s103
    %s107 = sphi 0, %s106
    %s123 = sphi 0, %s107
  $region4: #{tpu_custom_call.1} parent=0 // loop_header_branch
    %12 = sbr.rel (%p10) target = $region8
  $region5: #{tpu_custom_call.1} parent=0 // loop_body
    %s14 = ssub.s32 %s9, 1
    %s15 = ssub.s32 %s9, 2
    %s22 = sadd.s32 1, %s17
    %p23 = scmp.ge.s32.totalorder %s22, 2
    %s24 = scalar_select %p23, 0, %s22
    %s25 = sadd.s32 1, %s16
    %s26 = scalar_select %p23, %s25, %s16
    %p27 = scmp.ge.s32.totalorder %s26, 2
    %s28 = scalar_select %p27, 0, %s26
    %s29 = ssub.s32 %s16, %s28
    %s30 = ssub.s32 %s17, %s24
    %s31 = sor.u32 %s29, %s30
    %p32 = scmp.eq.s32.totalorder %s31, 0
    %s34 = sadd.s32 %s33, 1
    %s35 = scalar_select %p32, %s33, %s34
    %p38 = pneg %p32
    %p39 = scmp.eq.s32.totalorder %s9, 3
    %p40 = por %p38, %p39
    %p41 = scmp.ne.s32.totalorder %s33, %s36
    %p42 = scmp.eq.s32.totalorder %s9, 0
    %p43 = por %p41, %p42
    %p44 = scmp.ne.s32.totalorder %s33, %s36
    %p45 = scmp.eq.s32.totalorder %s14, 3
    %p46 = por %p44, %p45
    %p47 = scmp.ne.s32.totalorder %s36, %s37
    %p48 = scmp.eq.s32.totalorder %s14, 0
    %p49 = por %p47, %p48
    %p50 = scmp.ne.s32.totalorder %s36, %s37
    %p51 = scmp.eq.s32.totalorder %s15, 3
    %p52 = por %p50, %p51
    %p54 = scmp.ne.s32.totalorder %s37, %s53
    %p55 = scmp.eq.s32.totalorder %s15, 0
    %p56 = por %p54, %p55
    %s58 = sadd.s32 %s57, 1
    %p61 = scmp.eq.s32.totalorder %s9, 3
    %p62 = scmp.ne.s32.totalorder %s57, %s59
    %p63 = scmp.eq.s32.totalorder %s9, 0
    %p64 = por %p62, %p63
    %p65 = scmp.ne.s32.totalorder %s57, %s59
    %p66 = scmp.eq.s32.totalorder %s14, 3
    %p67 = por %p65, %p66
    %p68 = scmp.ne.s32.totalorder %s59, %s60
    %p69 = scmp.eq.s32.totalorder %s14, 0
    %p70 = por %p68, %p69
    %p71 = scmp.ne.s32.totalorder %s59, %s60
    %p72 = scmp.eq.s32.totalorder %s15, 3
    %p73 = por %p71, %p72
    %p75 = scmp.ne.s32.totalorder %s60, %s74
    %p76 = scmp.eq.s32.totalorder %s15, 0
    %p77 = por %p75, %p76
    %s79 = sadd.s32 %s78, 1
    %p82 = scmp.eq.s32.totalorder %s9, 3
    %p83 = scmp.ne.s32.totalorder %s78, %s80
    %p84 = scmp.eq.s32.totalorder %s9, 0
    %p85 = por %p83, %p84
    %p86 = scmp.ne.s32.totalorder %s78, %s80
    %p87 = scmp.eq.s32.totalorder %s14, 3
    %p88 = por %p86, %p87
    %p89 = scmp.ne.s32.totalorder %s80, %s81
    %p90 = scmp.eq.s32.totalorder %s14, 0
    %p91 = por %p89, %p90
    %p92 = scmp.ne.s32.totalorder %s80, %s81
    %p93 = scmp.eq.s32.totalorder %s15, 3
    %p94 = por %p92, %p93
    %p96 = scmp.ne.s32.totalorder %s81, %s95
    %p97 = scmp.eq.s32.totalorder %s15, 0
    %p98 = por %p96, %p97
    %s99 = ssub.s32 %s16, %s28
    %s100 = ssub.s32 %s17, %s24
    %s101 = sor.u32 %s99, %s100
    %p102 = scmp.eq.s32.totalorder %s101, 0
    %s104 = sadd.s32 %s103, 1
    %s105 = scalar_select %p102, %s103, %s104
    %p108 = pneg %p102
    %p109 = scmp.eq.s32.totalorder %s9, 3
    %p110 = por %p108, %p109
    %p111 = scmp.ne.s32.totalorder %s103, %s106
    %p112 = scmp.eq.s32.totalorder %s9, 0
    %p113 = por %p111, %p112
    %p114 = scmp.ne.s32.totalorder %s103, %s106
    %p115 = scmp.eq.s32.totalorder %s14, 3
    %p116 = por %p114, %p115
    %p117 = scmp.ne.s32.totalorder %s106, %s107
    %p118 = scmp.eq.s32.totalorder %s14, 0
    %p119 = por %p117, %p118
    %p120 = scmp.ne.s32.totalorder %s106, %s107
    %p121 = scmp.eq.s32.totalorder %s15, 3
    %p122 = por %p120, %p121
    %p124 = scmp.ne.s32.totalorder %s107, %s123
    %p125 = scmp.eq.s32.totalorder %s15, 0
    %p126 = por %p124, %p125
    %p127 = scmp.le.s32.totalorder 1, %s9
    %p128 = scmp.lt.s32.totalorder %s9, 5
    %p129 = pnand %p127, %p128
    %p130 = pneg %p129
    // Predicated region
    $region9: #{tpu_custom_call.1} parent=5 // pred_check
      _
    $region10: #{tpu_custom_call.1} parent=5 // pred_check_branch
      %132 = sbr.rel (%p129) target = $region12
    $region11: #{tpu_custom_call.1} parent=5 // pred_region
      %s133 = ssub.s32 %s9, 1
      // Predicated region
      $region13: #{tpu_custom_call.1} parent=11 // pred_check
        %p134 = pneg %p70
      $region14: #{tpu_custom_call.1} parent=11 // pred_check_branch
        %136 = sbr.rel (%p134) target = $region16
      $region15: #{tpu_custom_call.1} parent=11 // pred_region
        _
      $region16: #{tpu_custom_call.1} parent=11 // pred_fallthru
        _
      // Predicated region
      $region17: #{tpu_custom_call.1} parent=11 // pred_check
        %p137 = pneg %p91
      $region18: #{tpu_custom_call.1} parent=11 // pred_check_branch
        %139 = sbr.rel (%p137) target = $region20
      $region19: #{tpu_custom_call.1} parent=11 // pred_region
        _
      $region20: #{tpu_custom_call.1} parent=11 // pred_fallthru
        _
    $region12: #{tpu_custom_call.1} parent=5 // pred_fallthru
      _
    %p140 = scmp.lt.s32.totalorder %s9, 4
    // Predicated region
    $region21: #{tpu_custom_call.1} parent=5 // pred_check
      %p141 = pneg %p140
    $region22: #{tpu_custom_call.1} parent=5 // pred_check_branch
      %143 = sbr.rel (%p141) target = $region24
    $region23: #{tpu_custom_call.1} parent=5 // pred_region
      // Predicated region
      $region25: #{tpu_custom_call.1} parent=23 // pred_check
        %p144 = pneg %p43
      $region26: #{tpu_custom_call.1} parent=23 // pred_check_branch
        %146 = sbr.rel (%p144) target = $region28
      $region27: #{tpu_custom_call.1} parent=23 // pred_region
        %p147 = scmp.lt.s32.totalorder %s16, 1
        %s148 = scalar_select %p147, %s16, 1
        %p149 = scmp.lt.s32.totalorder %s17, 1
        %s150 = scalar_select %p149, %s17, 1
        %s151 = smul.addr %s150, 40
        %s152 = smul.addr %s148, 80
        %s153 = sadd.s32 %s151, %s152
        %s154 = smul.addr %s153, 8
        %s155 = scalar_lea.vmem %s0, %s154
      $region28: #{tpu_custom_call.1} parent=23 // pred_fallthru
        _
    $region24: #{tpu_custom_call.1} parent=5 // pred_fallthru
      _
    %p156 = scmp.le.s32.totalorder 1, %s9
    %p157 = scmp.lt.s32.totalorder %s9, 5
    %p158 = pnand %p156, %p157
    %p159 = pneg %p158
    // Predicated region
    $region29: #{tpu_custom_call.1} parent=5 // pred_check
      _
    $region30: #{tpu_custom_call.1} parent=5 // pred_check_branch
      %161 = sbr.rel (%p158) target = $region32
    $region31: #{tpu_custom_call.1} parent=5 // pred_region
      %s162 = ssub.s32 %s9, 1
      %p163 = scmp.lt.s32.totalorder %s18, 1
      %s164 = scalar_select %p163, %s18, 1
      %p165 = scmp.lt.s32.totalorder %s19, 1
      %s166 = scalar_select %p165, %s19, 1
      %s167 = smul.addr %s166, 40
      %s168 = smul.addr %s164, 80
      %s169 = sadd.s32 %s167, %s168
      %s170 = smul.addr %s169, 8
      %s171 = scalar_lea.vmem %s0, %s170
      %p172 = pneg %p49
      %p173 = pneg %p46
      %p174 = pneg %p70
      %p175 = pneg %p67
      %p176 = pneg %p91
      %p177 = pneg %p88
      %p178 = pneg %p119
      %p179 = pneg %p116
      %s180 = smul.u32 4, %s19
      %p181 = scmp.lt.s32.totalorder %s18, 1
      %s182 = scalar_select %p181, %s18, 1
      %p183 = scmp.lt.s32.totalorder %s180, 7
      %s184 = scalar_select %p183, %s180, 7
      %s185 = smul.addr %s182, 8
      %s186 = sadd.s32 %s184, %s185
      %s187 = smul.addr %s186, 8
      %s188 = scalar_lea.vmem %s3, %s187
      %p189 = scmp.lt.s32.totalorder %s18, 1
      %s190 = scalar_select %p189, %s18, 1
      %p191 = scmp.lt.s32.totalorder %s19, 1
      %s192 = scalar_select %p191, %s19, 1
      %s193 = smul.addr %s192, 40
      %s194 = smul.addr %s190, 80
      %s195 = sadd.s32 %s193, %s194
      %s196 = smul.addr %s195, 8
      %s197 = scalar_lea.vmem %s0, %s196
      %s198 = smul.u32 4, %s19
      %p199 = scmp.lt.s32.totalorder %s18, 1
      %s200 = scalar_select %p199, %s18, 1
      %p201 = scmp.lt.s32.totalorder %s198, 7
      %s202 = scalar_select %p201, %s198, 7
      %s203 = smul.addr %s200, 8
      %s204 = sadd.s32 %s202, %s203
      %s205 = smul.addr %s204, 8
      %s206 = scalar_lea.vmem %s3, %s205
      %s207 = smul.u32 4, %s19
      %v208 = vld [vmem:[%s197] sm:$0xff]
      %v209 = vld [vmem:[%s197 + $0x10] sm:$0xff]
      %v210 = vld [vmem:[%s197 + $0x20] sm:$0xff]
      %v211 = vld [vmem:[%s197 + $0x30] sm:$0xff]
      %v212 = vld [vmem:[%s1] sm:$0xf]
      %s213 = scalar_lea.vmem %s197, 80
      %v214 = vld [vmem:[%s213] sm:$0xff]
      %v215 = vld [vmem:[%s213 + $0x10] sm:$0xff]
      %v216 = vld [vmem:[%s213 + $0x20] sm:$0xff]
      %v217 = vld [vmem:[%s213 + $0x30] sm:$0xff]
      %s218 = scalar_lea.vmem %s1, 4
      %v219 = vld [vmem:[%s218] sm:$0xf]
      %vm220 = vcmask 31744
      %v222 = vsel %vm220, %v214, 0
      %v225 = vsel %vm220, %v215, 0
      %v228 = vsel %vm220, %v216, 0
      %v231 = vsel %vm220, %v217, 0
      %vm233 = vcmask 1043456
      %v235 = vsel %vm233, %v219, 0
      %237 = vmatprep.subr.mxu0 0.0
      %238 = vmatpush1.msra.mxu0 0.0
      %239 = vmatprep.subr.mxu0 0.0
      %240 = vmatpush1.msra.mxu0 0.0
      %241 = vmatprep.subr.mxu0 0.0
      %242 = vmatpush1.msra.mxu0 0.0
      %243 = vmatprep.subr.mxu0 0.0
      %244 = vmatpush1.msra.mxu0 0.0
      %245 = vmatprep.subr.mxu0 0.0
      %246 = vmatpush1.msra.mxu0 0.0
      %247 = vmatprep.subr.mxu0 0.0
      %248 = vmatpush1.msra.mxu0 0.0
      %249 = vmatprep.subr.mxu0 0.0
      %250 = vmatpush1.msra.mxu0 0.0
      %251 = vmatprep.subr.mxu0 0.0
      %252 = vmatpush1.msra.mxu0 0.0
      %253 = vmatprep.subr.mxu0 0.0
      %254 = vmatpush1.msra.mxu0 0.0
      %255 = vmatprep.subr.mxu0 0.0
      %256 = vmatpush1.msra.mxu0 0.0
      %257 = vmatprep.subr.mxu0 0.0
      %258 = vmatpush1.msra.mxu0 0.0
      %259 = vmatprep.subr.mxu0 0.0
      %260 = vmatpush1.msra.mxu0 0.0
      %261 = vmatprep.subr.mxu0 0.0
      %262 = vmatpush1.msra.mxu0 0.0
      %263 = vmatprep.subr.mxu0 0.0
      %264 = vmatpush1.msra.mxu0 0.0
      %265 = vmatprep.subr.mxu0 0.0
      %266 = vmatpush1.msra.mxu0 0.0
      %267 = vmatprep.subr.mxu0 0.0
      %268 = vmatpush1.msra.mxu0 %v235
      %269 = vmatprep.subr.mxu0 0.0
      %270 = vmatpush2.msra.mxu0 0.0
      %271 = vmatprep.subr.mxu0 0.0
      %272 = vmatpush2.msra.mxu0 0.0
      %273 = vmatprep.subr.mxu0 0.0
      %274 = vmatpush2.msra.mxu0 0.0
      %275 = vmatprep.subr.mxu0 0.0
      %276 = vmatpush2.msra.mxu0 0.0
      %277 = vmatprep.subr.mxu0 0.0
      %278 = vmatpush2.msra.mxu0 0.0
      %279 = vmatprep.subr.mxu0 0.0
      %280 = vmatpush2.msra.mxu0 0.0
      %281 = vmatprep.subr.mxu0 0.0
      %282 = vmatpush2.msra.mxu0 0.0
      %283 = vmatprep.subr.mxu0 0.0
      %284 = vmatpush2.msra.mxu0 0.0
      %285 = vmatprep.subr.mxu0 0.0
      %286 = vmatpush2.msra.mxu0 0.0
      %287 = vmatprep.subr.mxu0 0.0
      %288 = vmatpush2.msra.mxu0 0.0
      %289 = vmatprep.subr.mxu0 0.0
      %290 = vmatpush2.msra.mxu0 0.0
      %291 = vmatprep.subr.mxu0 0.0
      %292 = vmatpush2.msra.mxu0 0.0
      %293 = vmatprep.subr.mxu0 0.0
      %294 = vmatpush2.msra.mxu0 0.0
      %295 = vmatprep.subr.mxu0 0.0
      %296 = vmatpush2.msra.mxu0 0.0
      %297 = vmatprep.subr.mxu0 0.0
      %298 = vmatpush2.msra.mxu0 0.0
      %299 = vmatprep.subr.mxu0 0.0
      %300 = vmatpush2.msra.mxu0 0.0
      %301 = vmatprep.mubr.f32.mxu0 0.0
      %302 = vmatmul.mubr.f32.gmra.mxu0 %v222
      %v303 = vpop.f32.mrf.mxu0
      %v304 = vadd.f32 0.0, %v303
      %v305 = vpop.f32.mrf.mxu0
      %306 = vmatprep.mubr.f32.mxu0 0.0
      %307 = vmatmul.mubr.f32.gmra.mxu0 %v225
      %v308 = vpop.f32.mrf.mxu0
      %v309 = vadd.f32 0.0, %v308
      %v310 = vpop.f32.mrf.mxu0
      %311 = vmatprep.mubr.f32.mxu0 0.0
      %312 = vmatmul.mubr.f32.gmra.mxu0 %v228
      %v313 = vpop.f32.mrf.mxu0
      %v314 = vadd.f32 0.0, %v313
      %v315 = vpop.f32.mrf.mxu0
      %316 = vmatprep.mubr.f32.mxu0 0.0
      %317 = vmatmul.mubr.f32.gmra.mxu0 %v231
      %v318 = vpop.f32.mrf.mxu0
      %v319 = vadd.f32 0.0, %v318
      %v320 = vpop.f32.mrf.mxu0
      %321 = vdwg.mxu0
      %v323 = vsel %vm220, %v208, 0
      %v326 = vsel %vm220, %v209, 0
      %v329 = vsel %vm220, %v210, 0
      %v332 = vsel %vm220, %v211, 0
      %v335 = vsel %vm233, %v212, 0
      %337 = vmatprep.subr.mxu0 0.0
      %338 = vmatpush1.msra.mxu0 0.0
      %339 = vmatprep.subr.mxu0 0.0
      %340 = vmatpush1.msra.mxu0 0.0
      %341 = vmatprep.subr.mxu0 0.0
      %342 = vmatpush1.msra.mxu0 0.0
      %343 = vmatprep.subr.mxu0 0.0
      %344 = vmatpush1.msra.mxu0 0.0
      %345 = vmatprep.subr.mxu0 0.0
      %346 = vmatpush1.msra.mxu0 0.0
      %347 = vmatprep.subr.mxu0 0.0
      %348 = vmatpush1.msra.mxu0 0.0
      %349 = vmatprep.subr.mxu0 0.0
      %350 = vmatpush1.msra.mxu0 0.0
      %351 = vmatprep.subr.mxu0 0.0
      %352 = vmatpush1.msra.mxu0 0.0
      %353 = vmatprep.subr.mxu0 0.0
      %354 = vmatpush1.msra.mxu0 0.0
      %355 = vmatprep.subr.mxu0 0.0
      %356 = vmatpush1.msra.mxu0 0.0
      %357 = vmatprep.subr.mxu0 0.0
      %358 = vmatpush1.msra.mxu0 0.0
      %359 = vmatprep.subr.mxu0 0.0
      %360 = vmatpush1.msra.mxu0 0.0
      %361 = vmatprep.subr.mxu0 0.0
      %362 = vmatpush1.msra.mxu0 0.0
      %363 = vmatprep.subr.mxu0 0.0
      %364 = vmatpush1.msra.mxu0 0.0
      %365 = vmatprep.subr.mxu0 0.0
      %366 = vmatpush1.msra.mxu0 0.0
      %367 = vmatprep.subr.mxu0 0.0
      %368 = vmatpush1.msra.mxu0 %v335
      %369 = vmatprep.subr.mxu0 0.0
      %370 = vmatpush2.msra.mxu0 0.0
      %371 = vmatprep.subr.mxu0 0.0
      %372 = vmatpush2.msra.mxu0 0.0
      %373 = vmatprep.subr.mxu0 0.0
      %374 = vmatpush2.msra.mxu0 0.0
      %375 = vmatprep.subr.mxu0 0.0
      %376 = vmatpush2.msra.mxu0 0.0
      %377 = vmatprep.subr.mxu0 0.0
      %378 = vmatpush2.msra.mxu0 0.0
      %379 = vmatprep.subr.mxu0 0.0
      %380 = vmatpush2.msra.mxu0 0.0
      %381 = vmatprep.subr.mxu0 0.0
      %382 = vmatpush2.msra.mxu0 0.0
      %383 = vmatprep.subr.mxu0 0.0
      %384 = vmatpush2.msra.mxu0 0.0
      %385 = vmatprep.subr.mxu0 0.0
      %386 = vmatpush2.msra.mxu0 0.0
      %387 = vmatprep.subr.mxu0 0.0
      %388 = vmatpush2.msra.mxu0 0.0
      %389 = vmatprep.subr.mxu0 0.0
      %390 = vmatpush2.msra.mxu0 0.0
      %391 = vmatprep.subr.mxu0 0.0
      %392 = vmatpush2.msra.mxu0 0.0
      %393 = vmatprep.subr.mxu0 0.0
      %394 = vmatpush2.msra.mxu0 0.0
      %395 = vmatprep.subr.mxu0 0.0
      %396 = vmatpush2.msra.mxu0 0.0
      %397 = vmatprep.subr.mxu0 0.0
      %398 = vmatpush2.msra.mxu0 0.0
      %399 = vmatprep.subr.mxu0 0.0
      %400 = vmatpush2.msra.mxu0 0.0
      %401 = vmatprep.mubr.f32.mxu0 0.0
      %402 = vmatmul.mubr.f32.gmra.mxu0 %v323
      %v403 = vpop.f32.mrf.mxu0
      %v404 = vadd.f32 %v304, %v403
      %v405 = vpop.f32.mrf.mxu0
      %406 = vmatprep.mubr.f32.mxu0 0.0
      %407 = vmatmul.mubr.f32.gmra.mxu0 %v326
      %v408 = vpop.f32.mrf.mxu0
      %v409 = vadd.f32 %v309, %v408
      %v410 = vpop.f32.mrf.mxu0
      %411 = vmatprep.mubr.f32.mxu0 0.0
      %412 = vmatmul.mubr.f32.gmra.mxu0 %v329
      %v413 = vpop.f32.mrf.mxu0
      %v414 = vadd.f32 %v314, %v413
      %v415 = vpop.f32.mrf.mxu0
      %416 = vmatprep.mubr.f32.mxu0 0.0
      %417 = vmatmul.mubr.f32.gmra.mxu0 %v332
      %v418 = vpop.f32.mrf.mxu0
      %v419 = vadd.f32 %v319, %v418
      %v420 = vpop.f32.mrf.mxu0
      %421 = vdwg.mxu0
      %v422 = vld [vmem:[%s197 + $0x1] sm:$0xff]
      %v423 = vld [vmem:[%s197 + $0x11] sm:$0xff]
      %v424 = vld [vmem:[%s197 + $0x21] sm:$0xff]
      %v425 = vld [vmem:[%s197 + $0x31] sm:$0xff]
      %s426 = scalar_lea.vmem %s1, 8
      %v427 = vld [vmem:[%s426] sm:$0xf]
      %v429 = vsel %vm220, %v422, 0
      %v432 = vsel %vm220, %v423, 0
      %v435 = vsel %vm220, %v424, 0
      %v438 = vsel %vm220, %v425, 0
      %v441 = vsel %vm233, %v427, 0
      %443 = vmatprep.subr.mxu0 0.0
      %444 = vmatpush1.msra.mxu0 0.0
      %445 = vmatprep.subr.mxu0 0.0
      %446 = vmatpush1.msra.mxu0 0.0
      %447 = vmatprep.subr.mxu0 0.0
      %448 = vmatpush1.msra.mxu0 0.0
      %449 = vmatprep.subr.mxu0 0.0
      %450 = vmatpush1.msra.mxu0 0.0
      %451 = vmatprep.subr.mxu0 0.0
      %452 = vmatpush1.msra.mxu0 0.0
      %453 = vmatprep.subr.mxu0 0.0
      %454 = vmatpush1.msra.mxu0 0.0
      %455 = vmatprep.subr.mxu0 0.0
      %456 = vmatpush1.msra.mxu0 0.0
      %457 = vmatprep.subr.mxu0 0.0
      %458 = vmatpush1.msra.mxu0 0.0
      %459 = vmatprep.subr.mxu0 0.0
      %460 = vmatpush1.msra.mxu0 0.0
      %461 = vmatprep.subr.mxu0 0.0
      %462 = vmatpush1.msra.mxu0 0.0
      %463 = vmatprep.subr.mxu0 0.0
      %464 = vmatpush1.msra.mxu0 0.0
      %465 = vmatprep.subr.mxu0 0.0
      %466 = vmatpush1.msra.mxu0 0.0
      %467 = vmatprep.subr.mxu0 0.0
      %468 = vmatpush1.msra.mxu0 0.0
      %469 = vmatprep.subr.mxu0 0.0
      %470 = vmatpush1.msra.mxu0 0.0
      %471 = vmatprep.subr.mxu0 0.0
      %472 = vmatpush1.msra.mxu0 0.0
      %473 = vmatprep.subr.mxu0 0.0
      %474 = vmatpush1.msra.mxu0 %v441
      %475 = vmatprep.subr.mxu0 0.0
      %476 = vmatpush2.msra.mxu0 0.0
      %477 = vmatprep.subr.mxu0 0.0
      %478 = vmatpush2.msra.mxu0 0.0
      %479 = vmatprep.subr.mxu0 0.0
      %480 = vmatpush2.msra.mxu0 0.0
      %481 = vmatprep.subr.mxu0 0.0
      %482 = vmatpush2.msra.mxu0 0.0
      %483 = vmatprep.subr.mxu0 0.0
      %484 = vmatpush2.msra.mxu0 0.0
      %485 = vmatprep.subr.mxu0 0.0
      %486 = vmatpush2.msra.mxu0 0.0
      %487 = vmatprep.subr.mxu0 0.0
      %488 = vmatpush2.msra.mxu0 0.0
      %489 = vmatprep.subr.mxu0 0.0
      %490 = vmatpush2.msra.mxu0 0.0
      %491 = vmatprep.subr.mxu0 0.0
      %492 = vmatpush2.msra.mxu0 0.0
      %493 = vmatprep.subr.mxu0 0.0
      %494 = vmatpush2.msra.mxu0 0.0
      %495 = vmatprep.subr.mxu0 0.0
      %496 = vmatpush2.msra.mxu0 0.0
      %497 = vmatprep.subr.mxu0 0.0
      %498 = vmatpush2.msra.mxu0 0.0
      %499 = vmatprep.subr.mxu0 0.0
      %500 = vmatpush2.msra.mxu0 0.0
      %501 = vmatprep.subr.mxu0 0.0
      %502 = vmatpush2.msra.mxu0 0.0
      %503 = vmatprep.subr.mxu0 0.0
      %504 = vmatpush2.msra.mxu0 0.0
      %505 = vmatprep.subr.mxu0 0.0
      %506 = vmatpush2.msra.mxu0 0.0
      %507 = vmatprep.mubr.f32.mxu0 0.0
      %508 = vmatmul.mubr.f32.gmra.mxu0 %v429
      %v509 = vpop.f32.mrf.mxu0
      %v510 = vadd.f32 0.0, %v509
      %v511 = vpop.f32.mrf.mxu0
      %512 = vmatprep.mubr.f32.mxu0 0.0
      %513 = vmatmul.mubr.f32.gmra.mxu0 %v432
      %v514 = vpop.f32.mrf.mxu0
      %v515 = vadd.f32 0.0, %v514
      %v516 = vpop.f32.mrf.mxu0
      %517 = vmatprep.mubr.f32.mxu0 0.0
      %518 = vmatmul.mubr.f32.gmra.mxu0 %v435
      %v519 = vpop.f32.mrf.mxu0
      %v520 = vadd.f32 0.0, %v519
      %v521 = vpop.f32.mrf.mxu0
      %522 = vmatprep.mubr.f32.mxu0 0.0
      %523 = vmatmul.mubr.f32.gmra.mxu0 %v438
      %v524 = vpop.f32.mrf.mxu0
      %v525 = vadd.f32 0.0, %v524
      %v526 = vpop.f32.mrf.mxu0
      %527 = vdwg.mxu0
      %v528 = vadd.f32 %v404, %v510
      %v529 = vadd.f32 %v409, %v515
      %v530 = vadd.f32 %v414, %v520
      %v531 = vadd.f32 %v419, %v525
      %s532 = scalar_lea.vmem %s197, 160
      %v533 = vld [vmem:[%s532] sm:$0xff]
      %v534 = vld [vmem:[%s532 + $0x10] sm:$0xff]
      %v535 = vld [vmem:[%s532 + $0x20] sm:$0xff]
      %v536 = vld [vmem:[%s532 + $0x30] sm:$0xff]
      %s537 = scalar_lea.vmem %s1, 12
      %v538 = vld [vmem:[%s537] sm:$0xf]
      %v540 = vsel %vm220, %v533, 0
      %v543 = vsel %vm220, %v534, 0
      %v546 = vsel %vm220, %v535, 0
      %v549 = vsel %vm220, %v536, 0
      %v552 = vsel %vm233, %v538, 0
      %554 = vmatprep.subr.mxu0 0.0
      %555 = vmatpush1.msra.mxu0 0.0
      %556 = vmatprep.subr.mxu0 0.0
      %557 = vmatpush1.msra.mxu0 0.0
      %558 = vmatprep.subr.mxu0 0.0
      %559 = vmatpush1.msra.mxu0 0.0
      %560 = vmatprep.subr.mxu0 0.0
      %561 = vmatpush1.msra.mxu0 0.0
      %562 = vmatprep.subr.mxu0 0.0
      %563 = vmatpush1.msra.mxu0 0.0
      %564 = vmatprep.subr.mxu0 0.0
      %565 = vmatpush1.msra.mxu0 0.0
      %566 = vmatprep.subr.mxu0 0.0
      %567 = vmatpush1.msra.mxu0 0.0
      %568 = vmatprep.subr.mxu0 0.0
      %569 = vmatpush1.msra.mxu0 0.0
      %570 = vmatprep.subr.mxu0 0.0
      %571 = vmatpush1.msra.mxu0 0.0
      %572 = vmatprep.subr.mxu0 0.0
      %573 = vmatpush1.msra.mxu0 0.0
      %574 = vmatprep.subr.mxu0 0.0
      %575 = vmatpush1.msra.mxu0 0.0
      %576 = vmatprep.subr.mxu0 0.0
      %577 = vmatpush1.msra.mxu0 0.0
      %578 = vmatprep.subr.mxu0 0.0
      %579 = vmatpush1.msra.mxu0 0.0
      %580 = vmatprep.subr.mxu0 0.0
      %581 = vmatpush1.msra.mxu0 0.0
      %582 = vmatprep.subr.mxu0 0.0
      %583 = vmatpush1.msra.mxu0 0.0
      %584 = vmatprep.subr.mxu0 0.0
      %585 = vmatpush1.msra.mxu0 %v552
      %586 = vmatprep.subr.mxu0 0.0
      %587 = vmatpush2.msra.mxu0 0.0
      %588 = vmatprep.subr.mxu0 0.0
      %589 = vmatpush2.msra.mxu0 0.0
      %590 = vmatprep.subr.mxu0 0.0
      %591 = vmatpush2.msra.mxu0 0.0
      %592 = vmatprep.subr.mxu0 0.0
      %593 = vmatpush2.msra.mxu0 0.0
      %594 = vmatprep.subr.mxu0 0.0
      %595 = vmatpush2.msra.mxu0 0.0
      %596 = vmatprep.subr.mxu0 0.0
      %597 = vmatpush2.msra.mxu0 0.0
      %598 = vmatprep.subr.mxu0 0.0
      %599 = vmatpush2.msra.mxu0 0.0
      %600 = vmatprep.subr.mxu0 0.0
      %601 = vmatpush2.msra.mxu0 0.0
      %602 = vmatprep.subr.mxu0 0.0
      %603 = vmatpush2.msra.mxu0 0.0
      %604 = vmatprep.subr.mxu0 0.0
      %605 = vmatpush2.msra.mxu0 0.0
      %606 = vmatprep.subr.mxu0 0.0
      %607 = vmatpush2.msra.mxu0 0.0
      %608 = vmatprep.subr.mxu0 0.0
      %609 = vmatpush2.msra.mxu0 0.0
      %610 = vmatprep.subr.mxu0 0.0
      %611 = vmatpush2.msra.mxu0 0.0
      %612 = vmatprep.subr.mxu0 0.0
      %613 = vmatpush2.msra.mxu0 0.0
      %614 = vmatprep.subr.mxu0 0.0
      %615 = vmatpush2.msra.mxu0 0.0
      %616 = vmatprep.subr.mxu0 0.0
      %617 = vmatpush2.msra.mxu0 0.0
      %618 = vmatprep.mubr.f32.mxu0 0.0
      %619 = vmatmul.mubr.f32.gmra.mxu0 %v540
      %v620 = vpop.f32.mrf.mxu0
      %v621 = vadd.f32 0.0, %v620
      %v622 = vpop.f32.mrf.mxu0
      %623 = vmatprep.mubr.f32.mxu0 0.0
      %624 = vmatmul.mubr.f32.gmra.mxu0 %v543
      %v625 = vpop.f32.mrf.mxu0
      %v626 = vadd.f32 0.0, %v625
      %v627 = vpop.f32.mrf.mxu0
      %628 = vmatprep.mubr.f32.mxu0 0.0
      %629 = vmatmul.mubr.f32.gmra.mxu0 %v546
      %v630 = vpop.f32.mrf.mxu0
      %v631 = vadd.f32 0.0, %v630
      %v632 = vpop.f32.mrf.mxu0
      %633 = vmatprep.mubr.f32.mxu0 0.0
      %634 = vmatmul.mubr.f32.gmra.mxu0 %v549
      %v635 = vpop.f32.mrf.mxu0
      %v636 = vadd.f32 0.0, %v635
      %v637 = vpop.f32.mrf.mxu0
      %638 = vdwg.mxu0
      %v639 = vadd.f32 %v528, %v621
      %v640 = vadd.f32 %v529, %v626
      %v641 = vadd.f32 %v530, %v631
      %v642 = vadd.f32 %v531, %v636
      %s643 = scalar_lea.vmem %s197, 240
      %v644 = vld [vmem:[%s643] sm:$0xff]
      %v645 = vld [vmem:[%s643 + $0x10] sm:$0xff]
      %v646 = vld [vmem:[%s643 + $0x20] sm:$0xff]
      %v647 = vld [vmem:[%s643 + $0x30] sm:$0xff]
      %s648 = scalar_lea.vmem %s1, 16
      %v649 = vld [vmem:[%s648] sm:$0xf]
      %v651 = vsel %vm220, %v644, 0
      %v654 = vsel %vm220, %v645, 0
      %v657 = vsel %vm220, %v646, 0
      %v660 = vsel %vm220, %v647, 0
      %v663 = vsel %vm233, %v649, 0
      %665 = vmatprep.subr.mxu0 0.0
      %666 = vmatpush1.msra.mxu0 0.0
      %667 = vmatprep.subr.mxu0 0.0
      %668 = vmatpush1.msra.mxu0 0.0
      %669 = vmatprep.subr.mxu0 0.0
      %670 = vmatpush1.msra.mxu0 0.0
      %671 = vmatprep.subr.mxu0 0.0
      %672 = vmatpush1.msra.mxu0 0.0
      %673 = vmatprep.subr.mxu0 0.0
      %674 = vmatpush1.msra.mxu0 0.0
      %675 = vmatprep.subr.mxu0 0.0
      %676 = vmatpush1.msra.mxu0 0.0
      %677 = vmatprep.subr.mxu0 0.0
      %678 = vmatpush1.msra.mxu0 0.0
      %679 = vmatprep.subr.mxu0 0.0
      %680 = vmatpush1.msra.mxu0 0.0
      %681 = vmatprep.subr.mxu0 0.0
      %682 = vmatpush1.msra.mxu0 0.0
      %683 = vmatprep.subr.mxu0 0.0
      %684 = vmatpush1.msra.mxu0 0.0
      %685 = vmatprep.subr.mxu0 0.0
      %686 = vmatpush1.msra.mxu0 0.0
      %687 = vmatprep.subr.mxu0 0.0
      %688 = vmatpush1.msra.mxu0 0.0
      %689 = vmatprep.subr.mxu0 0.0
      %690 = vmatpush1.msra.mxu0 0.0
      %691 = vmatprep.subr.mxu0 0.0
      %692 = vmatpush1.msra.mxu0 0.0
      %693 = vmatprep.subr.mxu0 0.0
      %694 = vmatpush1.msra.mxu0 0.0
      %695 = vmatprep.subr.mxu0 0.0
      %696 = vmatpush1.msra.mxu0 %v663
      %697 = vmatprep.subr.mxu0 0.0
      %698 = vmatpush2.msra.mxu0 0.0
      %699 = vmatprep.subr.mxu0 0.0
      %700 = vmatpush2.msra.mxu0 0.0
      %701 = vmatprep.subr.mxu0 0.0
      %702 = vmatpush2.msra.mxu0 0.0
      %703 = vmatprep.subr.mxu0 0.0
      %704 = vmatpush2.msra.mxu0 0.0
      %705 = vmatprep.subr.mxu0 0.0
      %706 = vmatpush2.msra.mxu0 0.0
      %707 = vmatprep.subr.mxu0 0.0
      %708 = vmatpush2.msra.mxu0 0.0
      %709 = vmatprep.subr.mxu0 0.0
      %710 = vmatpush2.msra.mxu0 0.0
      %711 = vmatprep.subr.mxu0 0.0
      %712 = vmatpush2.msra.mxu0 0.0
      %713 = vmatprep.subr.mxu0 0.0
      %714 = vmatpush2.msra.mxu0 0.0
      %715 = vmatprep.subr.mxu0 0.0
      %716 = vmatpush2.msra.mxu0 0.0
      %717 = vmatprep.subr.mxu0 0.0
      %718 = vmatpush2.msra.mxu0 0.0
      %719 = vmatprep.subr.mxu0 0.0
      %720 = vmatpush2.msra.mxu0 0.0
      %721 = vmatprep.subr.mxu0 0.0
      %722 = vmatpush2.msra.mxu0 0.0
      %723 = vmatprep.subr.mxu0 0.0
      %724 = vmatpush2.msra.mxu0 0.0
      %725 = vmatprep.subr.mxu0 0.0
      %726 = vmatpush2.msra.mxu0 0.0
      %727 = vmatprep.subr.mxu0 0.0
      %728 = vmatpush2.msra.mxu0 0.0
      %729 = vmatprep.mubr.f32.mxu0 0.0
      %730 = vmatmul.mubr.f32.gmra.mxu0 %v651
      %v731 = vpop.f32.mrf.mxu0
      %v732 = vadd.f32 0.0, %v731
      %v733 = vpop.f32.mrf.mxu0
      %734 = vmatprep.mubr.f32.mxu0 0.0
      %735 = vmatmul.mubr.f32.gmra.mxu0 %v654
      %v736 = vpop.f32.mrf.mxu0
      %v737 = vadd.f32 0.0, %v736
      %v738 = vpop.f32.mrf.mxu0
      %739 = vmatprep.mubr.f32.mxu0 0.0
      %740 = vmatmul.mubr.f32.gmra.mxu0 %v657
      %v741 = vpop.f32.mrf.mxu0
      %v742 = vadd.f32 0.0, %v741
      %v743 = vpop.f32.mrf.mxu0
      %744 = vmatprep.mubr.f32.mxu0 0.0
      %745 = vmatmul.mubr.f32.gmra.mxu0 %v660
      %v746 = vpop.f32.mrf.mxu0
      %v747 = vadd.f32 0.0, %v746
      %v748 = vpop.f32.mrf.mxu0
      %749 = vdwg.mxu0
      %v750 = vadd.f32 %v639, %v732
      %v751 = vadd.f32 %v640, %v737
      %v752 = vadd.f32 %v641, %v742
      %v753 = vadd.f32 %v642, %v747
      %v754 = vld [vmem:[%s532 + $0x1] sm:$0xff]
      %v755 = vld [vmem:[%s532 + $0x11] sm:$0xff]
      %v756 = vld [vmem:[%s532 + $0x21] sm:$0xff]
      %v757 = vld [vmem:[%s532 + $0x31] sm:$0xff]
      %s758 = scalar_lea.vmem %s1, 20
      %v759 = vld [vmem:[%s758] sm:$0xf]
      %v761 = vsel %vm220, %v754, 0
      %v764 = vsel %vm220, %v755, 0
      %v767 = vsel %vm220, %v756, 0
      %v770 = vsel %vm220, %v757, 0
      %v773 = vsel %vm233, %v759, 0
      %775 = vmatprep.subr.mxu0 0.0
      %776 = vmatpush1.msra.mxu0 0.0
      %777 = vmatprep.subr.mxu0 0.0
      %778 = vmatpush1.msra.mxu0 0.0
      %779 = vmatprep.subr.mxu0 0.0
      %780 = vmatpush1.msra.mxu0 0.0
      %781 = vmatprep.subr.mxu0 0.0
      %782 = vmatpush1.msra.mxu0 0.0
      %783 = vmatprep.subr.mxu0 0.0
      %784 = vmatpush1.msra.mxu0 0.0
      %785 = vmatprep.subr.mxu0 0.0
      %786 = vmatpush1.msra.mxu0 0.0
      %787 = vmatprep.subr.mxu0 0.0
      %788 = vmatpush1.msra.mxu0 0.0
      %789 = vmatprep.subr.mxu0 0.0
      %790 = vmatpush1.msra.mxu0 0.0
      %791 = vmatprep.subr.mxu0 0.0
      %792 = vmatpush1.msra.mxu0 0.0
      %793 = vmatprep.subr.mxu0 0.0
      %794 = vmatpush1.msra.mxu0 0.0
      %795 = vmatprep.subr.mxu0 0.0
      %796 = vmatpush1.msra.mxu0 0.0
      %797 = vmatprep.subr.mxu0 0.0
      %798 = vmatpush1.msra.mxu0 0.0
      %799 = vmatprep.subr.mxu0 0.0
      %800 = vmatpush1.msra.mxu0 0.0
      %801 = vmatprep.subr.mxu0 0.0
      %802 = vmatpush1.msra.mxu0 0.0
      %803 = vmatprep.subr.mxu0 0.0
      %804 = vmatpush1.msra.mxu0 0.0
      %805 = vmatprep.subr.mxu0 0.0
      %806 = vmatpush1.msra.mxu0 %v773
      %807 = vmatprep.subr.mxu0 0.0
      %808 = vmatpush2.msra.mxu0 0.0
      %809 = vmatprep.subr.mxu0 0.0
      %810 = vmatpush2.msra.mxu0 0.0
      %811 = vmatprep.subr.mxu0 0.0
      %812 = vmatpush2.msra.mxu0 0.0
      %813 = vmatprep.subr.mxu0 0.0
      %814 = vmatpush2.msra.mxu0 0.0
      %815 = vmatprep.subr.mxu0 0.0
      %816 = vmatpush2.msra.mxu0 0.0
      %817 = vmatprep.subr.mxu0 0.0
      %818 = vmatpush2.msra.mxu0 0.0
      %819 = vmatprep.subr.mxu0 0.0
      %820 = vmatpush2.msra.mxu0 0.0
      %821 = vmatprep.subr.mxu0 0.0
      %822 = vmatpush2.msra.mxu0 0.0
      %823 = vmatprep.subr.mxu0 0.0
      %824 = vmatpush2.msra.mxu0 0.0
      %825 = vmatprep.subr.mxu0 0.0
      %826 = vmatpush2.msra.mxu0 0.0
      %827 = vmatprep.subr.mxu0 0.0
      %828 = vmatpush2.msra.mxu0 0.0
      %829 = vmatprep.subr.mxu0 0.0
      %830 = vmatpush2.msra.mxu0 0.0
      %831 = vmatprep.subr.mxu0 0.0
      %832 = vmatpush2.msra.mxu0 0.0
      %833 = vmatprep.subr.mxu0 0.0
      %834 = vmatpush2.msra.mxu0 0.0
      %835 = vmatprep.subr.mxu0 0.0
      %836 = vmatpush2.msra.mxu0 0.0
      %837 = vmatprep.subr.mxu0 0.0
      %838 = vmatpush2.msra.mxu0 0.0
      %839 = vmatprep.mubr.f32.mxu0 0.0
      %840 = vmatmul.mubr.f32.gmra.mxu0 %v761
      %v841 = vpop.f32.mrf.mxu0
      %v842 = vadd.f32 0.0, %v841
      %v843 = vpop.f32.mrf.mxu0
      %844 = vmatprep.mubr.f32.mxu0 0.0
      %845 = vmatmul.mubr.f32.gmra.mxu0 %v764
      %v846 = vpop.f32.mrf.mxu0
      %v847 = vadd.f32 0.0, %v846
      %v848 = vpop.f32.mrf.mxu0
      %849 = vmatprep.mubr.f32.mxu0 0.0
      %850 = vmatmul.mubr.f32.gmra.mxu0 %v767
      %v851 = vpop.f32.mrf.mxu0
      %v852 = vadd.f32 0.0, %v851
      %v853 = vpop.f32.mrf.mxu0
      %854 = vmatprep.mubr.f32.mxu0 0.0
      %855 = vmatmul.mubr.f32.gmra.mxu0 %v770
      %v856 = vpop.f32.mrf.mxu0
      %v857 = vadd.f32 0.0, %v856
      %v858 = vpop.f32.mrf.mxu0
      %859 = vdwg.mxu0
      %v860 = vadd.f32 %v750, %v842
      %v861 = vadd.f32 %v751, %v847
      %v862 = vadd.f32 %v752, %v852
      %v863 = vadd.f32 %v753, %v857
      %s864 = scalar_lea.vmem %s197, 16
      %v865 = vld [vmem:[%s864] sm:$0xff]
      %v866 = vld [vmem:[%s864 + $0x10] sm:$0xff]
      %v867 = vld [vmem:[%s864 + $0x20] sm:$0xff]
      %v868 = vld [vmem:[%s864 + $0x30] sm:$0xff]
      %s869 = scalar_lea.vmem %s1, 24
      %v870 = vld [vmem:[%s869] sm:$0xf]
      %v872 = vsel %vm220, %v865, 0
      %v875 = vsel %vm220, %v866, 0
      %v878 = vsel %vm220, %v867, 0
      %v881 = vsel %vm220, %v868, 0
      %v884 = vsel %vm233, %v870, 0
      %886 = vmatprep.subr.mxu0 0.0
      %887 = vmatpush1.msra.mxu0 0.0
      %888 = vmatprep.subr.mxu0 0.0
      %889 = vmatpush1.msra.mxu0 0.0
      %890 = vmatprep.subr.mxu0 0.0
      %891 = vmatpush1.msra.mxu0 0.0
      %892 = vmatprep.subr.mxu0 0.0
      %893 = vmatpush1.msra.mxu0 0.0
      %894 = vmatprep.subr.mxu0 0.0
      %895 = vmatpush1.msra.mxu0 0.0
      %896 = vmatprep.subr.mxu0 0.0
      %897 = vmatpush1.msra.mxu0 0.0
      %898 = vmatprep.subr.mxu0 0.0
      %899 = vmatpush1.msra.mxu0 0.0
      %900 = vmatprep.subr.mxu0 0.0
      %901 = vmatpush1.msra.mxu0 0.0
      %902 = vmatprep.subr.mxu0 0.0
      %903 = vmatpush1.msra.mxu0 0.0
      %904 = vmatprep.subr.mxu0 0.0
      %905 = vmatpush1.msra.mxu0 0.0
      %906 = vmatprep.subr.mxu0 0.0
      %907 = vmatpush1.msra.mxu0 0.0
      %908 = vmatprep.subr.mxu0 0.0
      %909 = vmatpush1.msra.mxu0 0.0
      %910 = vmatprep.subr.mxu0 0.0
      %911 = vmatpush1.msra.mxu0 0.0
      %912 = vmatprep.subr.mxu0 0.0
      %913 = vmatpush1.msra.mxu0 0.0
      %914 = vmatprep.subr.mxu0 0.0
      %915 = vmatpush1.msra.mxu0 0.0
      %916 = vmatprep.subr.mxu0 0.0
      %917 = vmatpush1.msra.mxu0 %v884
      %918 = vmatprep.subr.mxu0 0.0
      %919 = vmatpush2.msra.mxu0 0.0
      %920 = vmatprep.subr.mxu0 0.0
      %921 = vmatpush2.msra.mxu0 0.0
      %922 = vmatprep.subr.mxu0 0.0
      %923 = vmatpush2.msra.mxu0 0.0
      %924 = vmatprep.subr.mxu0 0.0
      %925 = vmatpush2.msra.mxu0 0.0
      %926 = vmatprep.subr.mxu0 0.0
      %927 = vmatpush2.msra.mxu0 0.0
      %928 = vmatprep.subr.mxu0 0.0
      %929 = vmatpush2.msra.mxu0 0.0
      %930 = vmatprep.subr.mxu0 0.0
      %931 = vmatpush2.msra.mxu0 0.0
      %932 = vmatprep.subr.mxu0 0.0
      %933 = vmatpush2.msra.mxu0 0.0
      %934 = vmatprep.subr.mxu0 0.0
      %935 = vmatpush2.msra.mxu0 0.0
      %936 = vmatprep.subr.mxu0 0.0
      %937 = vmatpush2.msra.mxu0 0.0
      %938 = vmatprep.subr.mxu0 0.0
      %939 = vmatpush2.msra.mxu0 0.0
      %940 = vmatprep.subr.mxu0 0.0
      %941 = vmatpush2.msra.mxu0 0.0
      %942 = vmatprep.subr.mxu0 0.0
      %943 = vmatpush2.msra.mxu0 0.0
      %944 = vmatprep.subr.mxu0 0.0
      %945 = vmatpush2.msra.mxu0 0.0
      %946 = vmatprep.subr.mxu0 0.0
      %947 = vmatpush2.msra.mxu0 0.0
      %948 = vmatprep.subr.mxu0 0.0
      %949 = vmatpush2.msra.mxu0 0.0
      %950 = vmatprep.mubr.f32.mxu0 0.0
      %951 = vmatmul.mubr.f32.gmra.mxu0 %v872
      %v952 = vpop.f32.mrf.mxu0
      %v953 = vadd.f32 0.0, %v952
      %v954 = vpop.f32.mrf.mxu0
      %955 = vmatprep.mubr.f32.mxu0 0.0
      %956 = vmatmul.mubr.f32.gmra.mxu0 %v875
      %v957 = vpop.f32.mrf.mxu0
      %v958 = vadd.f32 0.0, %v957
      %v959 = vpop.f32.mrf.mxu0
      %960 = vmatprep.mubr.f32.mxu0 0.0
      %961 = vmatmul.mubr.f32.gmra.mxu0 %v878
      %v962 = vpop.f32.mrf.mxu0
      %v963 = vadd.f32 0.0, %v962
      %v964 = vpop.f32.mrf.mxu0
      %965 = vmatprep.mubr.f32.mxu0 0.0
      %966 = vmatmul.mubr.f32.gmra.mxu0 %v881
      %v967 = vpop.f32.mrf.mxu0
      %v968 = vadd.f32 0.0, %v967
      %v969 = vpop.f32.mrf.mxu0
      %970 = vdwg.mxu0
      %v971 = vadd.f32 %v860, %v953
      %v972 = vadd.f32 %v861, %v958
      %v973 = vadd.f32 %v862, %v963
      %v974 = vadd.f32 %v863, %v968
      %s975 = scalar_lea.vmem %s197, 96
      %v976 = vld [vmem:[%s975] sm:$0xff]
      %v977 = vld [vmem:[%s975 + $0x10] sm:$0xff]
      %v978 = vld [vmem:[%s975 + $0x20] sm:$0xff]
      %v979 = vld [vmem:[%s975 + $0x30] sm:$0xff]
      %s980 = scalar_lea.vmem %s1, 28
      %v981 = vld [vmem:[%s980] sm:$0xf]
      %v983 = vsel %vm220, %v976, 0
      %v986 = vsel %vm220, %v977, 0
      %v989 = vsel %vm220, %v978, 0
      %v992 = vsel %vm220, %v979, 0
      %v995 = vsel %vm233, %v981, 0
      %997 = vmatprep.subr.mxu0 0.0
      %998 = vmatpush1.msra.mxu0 0.0
      %999 = vmatprep.subr.mxu0 0.0
      %1000 = vmatpush1.msra.mxu0 0.0
      %1001 = vmatprep.subr.mxu0 0.0
      %1002 = vmatpush1.msra.mxu0 0.0
      %1003 = vmatprep.subr.mxu0 0.0
      %1004 = vmatpush1.msra.mxu0 0.0
      %1005 = vmatprep.subr.mxu0 0.0
      %1006 = vmatpush1.msra.mxu0 0.0
      %1007 = vmatprep.subr.mxu0 0.0
      %1008 = vmatpush1.msra.mxu0 0.0
      %1009 = vmatprep.subr.mxu0 0.0
      %1010 = vmatpush1.msra.mxu0 0.0
      %1011 = vmatprep.subr.mxu0 0.0
      %1012 = vmatpush1.msra.mxu0 0.0
      %1013 = vmatprep.subr.mxu0 0.0
      %1014 = vmatpush1.msra.mxu0 0.0
      %1015 = vmatprep.subr.mxu0 0.0
      %1016 = vmatpush1.msra.mxu0 0.0
      %1017 = vmatprep.subr.mxu0 0.0
      %1018 = vmatpush1.msra.mxu0 0.0
      %1019 = vmatprep.subr.mxu0 0.0
      %1020 = vmatpush1.msra.mxu0 0.0
      %1021 = vmatprep.subr.mxu0 0.0
      %1022 = vmatpush1.msra.mxu0 0.0
      %1023 = vmatprep.subr.mxu0 0.0
      %1024 = vmatpush1.msra.mxu0 0.0
      %1025 = vmatprep.subr.mxu0 0.0
      %1026 = vmatpush1.msra.mxu0 0.0
      %1027 = vmatprep.subr.mxu0 0.0
      %1028 = vmatpush1.msra.mxu0 %v995
      %1029 = vmatprep.subr.mxu0 0.0
      %1030 = vmatpush2.msra.mxu0 0.0
      %1031 = vmatprep.subr.mxu0 0.0
      %1032 = vmatpush2.msra.mxu0 0.0
      %1033 = vmatprep.subr.mxu0 0.0
      %1034 = vmatpush2.msra.mxu0 0.0
      %1035 = vmatprep.subr.mxu0 0.0
      %1036 = vmatpush2.msra.mxu0 0.0
      %1037 = vmatprep.subr.mxu0 0.0
      %1038 = vmatpush2.msra.mxu0 0.0
      %1039 = vmatprep.subr.mxu0 0.0
      %1040 = vmatpush2.msra.mxu0 0.0
      %1041 = vmatprep.subr.mxu0 0.0
      %1042 = vmatpush2.msra.mxu0 0.0
      %1043 = vmatprep.subr.mxu0 0.0
      %1044 = vmatpush2.msra.mxu0 0.0
      %1045 = vmatprep.subr.mxu0 0.0
      %1046 = vmatpush2.msra.mxu0 0.0
      %1047 = vmatprep.subr.mxu0 0.0
      %1048 = vmatpush2.msra.mxu0 0.0
      %1049 = vmatprep.subr.mxu0 0.0
      %1050 = vmatpush2.msra.mxu0 0.0
      %1051 = vmatprep.subr.mxu0 0.0
      %1052 = vmatpush2.msra.mxu0 0.0
      %1053 = vmatprep.subr.mxu0 0.0
      %1054 = vmatpush2.msra.mxu0 0.0
      %1055 = vmatprep.subr.mxu0 0.0
      %1056 = vmatpush2.msra.mxu0 0.0
      %1057 = vmatprep.subr.mxu0 0.0
      %1058 = vmatpush2.msra.mxu0 0.0
      %1059 = vmatprep.subr.mxu0 0.0
      %1060 = vmatpush2.msra.mxu0 0.0
      %1061 = vmatprep.mubr.f32.mxu0 0.0
      %1062 = vmatmul.mubr.f32.gmra.mxu0 %v983
      %v1063 = vpop.f32.mrf.mxu0
      %v1064 = vadd.f32 0.0, %v1063
      %v1065 = vpop.f32.mrf.mxu0
      %1066 = vmatprep.mubr.f32.mxu0 0.0
      %1067 = vmatmul.mubr.f32.gmra.mxu0 %v986
      %v1068 = vpop.f32.mrf.mxu0
      %v1069 = vadd.f32 0.0, %v1068
      %v1070 = vpop.f32.mrf.mxu0
      %1071 = vmatprep.mubr.f32.mxu0 0.0
      %1072 = vmatmul.mubr.f32.gmra.mxu0 %v989
      %v1073 = vpop.f32.mrf.mxu0
      %v1074 = vadd.f32 0.0, %v1073
      %v1075 = vpop.f32.mrf.mxu0
      %1076 = vmatprep.mubr.f32.mxu0 0.0
      %1077 = vmatmul.mubr.f32.gmra.mxu0 %v992
      %v1078 = vpop.f32.mrf.mxu0
      %v1079 = vadd.f32 0.0, %v1078
      %v1080 = vpop.f32.mrf.mxu0
      %1081 = vdwg.mxu0
      %v1082 = vadd.f32 %v971, %v1064
      %v1083 = vadd.f32 %v972, %v1069
      %v1084 = vadd.f32 %v973, %v1074
      %v1085 = vadd.f32 %v974, %v1079
      %v1086 = vld [vmem:[%s864 + $0x1] sm:$0xff]
      %v1087 = vld [vmem:[%s864 + $0x11] sm:$0xff]
      %v1088 = vld [vmem:[%s864 + $0x21] sm:$0xff]
      %v1089 = vld [vmem:[%s864 + $0x31] sm:$0xff]
      %s1090 = scalar_lea.vmem %s1, 32
      %v1091 = vld [vmem:[%s1090] sm:$0xf]
      %v1093 = vsel %vm220, %v1086, 0
      %v1096 = vsel %vm220, %v1087, 0
      %v1099 = vsel %vm220, %v1088, 0
      %v1102 = vsel %vm220, %v1089, 0
      %v1105 = vsel %vm233, %v1091, 0
      %1107 = vmatprep.subr.mxu0 0.0
      %1108 = vmatpush1.msra.mxu0 0.0
      %1109 = vmatprep.subr.mxu0 0.0
      %1110 = vmatpush1.msra.mxu0 0.0
      %1111 = vmatprep.subr.mxu0 0.0
      %1112 = vmatpush1.msra.mxu0 0.0
      %1113 = vmatprep.subr.mxu0 0.0
      %1114 = vmatpush1.msra.mxu0 0.0
      %1115 = vmatprep.subr.mxu0 0.0
      %1116 = vmatpush1.msra.mxu0 0.0
      %1117 = vmatprep.subr.mxu0 0.0
      %1118 = vmatpush1.msra.mxu0 0.0
      %1119 = vmatprep.subr.mxu0 0.0
      %1120 = vmatpush1.msra.mxu0 0.0
      %1121 = vmatprep.subr.mxu0 0.0
      %1122 = vmatpush1.msra.mxu0 0.0
      %1123 = vmatprep.subr.mxu0 0.0
      %1124 = vmatpush1.msra.mxu0 0.0
      %1125 = vmatprep.subr.mxu0 0.0
      %1126 = vmatpush1.msra.mxu0 0.0
      %1127 = vmatprep.subr.mxu0 0.0
      %1128 = vmatpush1.msra.mxu0 0.0
      %1129 = vmatprep.subr.mxu0 0.0
      %1130 = vmatpush1.msra.mxu0 0.0
      %1131 = vmatprep.subr.mxu0 0.0
      %1132 = vmatpush1.msra.mxu0 0.0
      %1133 = vmatprep.subr.mxu0 0.0
      %1134 = vmatpush1.msra.mxu0 0.0
      %1135 = vmatprep.subr.mxu0 0.0
      %1136 = vmatpush1.msra.mxu0 0.0
      %1137 = vmatprep.subr.mxu0 0.0
      %1138 = vmatpush1.msra.mxu0 %v1105
      %1139 = vmatprep.subr.mxu0 0.0
      %1140 = vmatpush2.msra.mxu0 0.0
      %1141 = vmatprep.subr.mxu0 0.0
      %1142 = vmatpush2.msra.mxu0 0.0
      %1143 = vmatprep.subr.mxu0 0.0
      %1144 = vmatpush2.msra.mxu0 0.0
      %1145 = vmatprep.subr.mxu0 0.0
      %1146 = vmatpush2.msra.mxu0 0.0
      %1147 = vmatprep.subr.mxu0 0.0
      %1148 = vmatpush2.msra.mxu0 0.0
      %1149 = vmatprep.subr.mxu0 0.0
      %1150 = vmatpush2.msra.mxu0 0.0
      %1151 = vmatprep.subr.mxu0 0.0
      %1152 = vmatpush2.msra.mxu0 0.0
      %1153 = vmatprep.subr.mxu0 0.0
      %1154 = vmatpush2.msra.mxu0 0.0
      %1155 = vmatprep.subr.mxu0 0.0
      %1156 = vmatpush2.msra.mxu0 0.0
      %1157 = vmatprep.subr.mxu0 0.0
      %1158 = vmatpush2.msra.mxu0 0.0
      %1159 = vmatprep.subr.mxu0 0.0
      %1160 = vmatpush2.msra.mxu0 0.0
      %1161 = vmatprep.subr.mxu0 0.0
      %1162 = vmatpush2.msra.mxu0 0.0
      %1163 = vmatprep.subr.mxu0 0.0
      %1164 = vmatpush2.msra.mxu0 0.0
      %1165 = vmatprep.subr.mxu0 0.0
      %1166 = vmatpush2.msra.mxu0 0.0
      %1167 = vmatprep.subr.mxu0 0.0
      %1168 = vmatpush2.msra.mxu0 0.0
      %1169 = vmatprep.subr.mxu0 0.0
      %1170 = vmatpush2.msra.mxu0 0.0
      %1171 = vmatprep.mubr.f32.mxu0 0.0
      %1172 = vmatmul.mubr.f32.gmra.mxu0 %v1093
      %v1173 = vpop.f32.mrf.mxu0
      %v1174 = vadd.f32 0.0, %v1173
      %v1175 = vpop.f32.mrf.mxu0
      %1176 = vmatprep.mubr.f32.mxu0 0.0
      %1177 = vmatmul.mubr.f32.gmra.mxu0 %v1096
      %v1178 = vpop.f32.mrf.mxu0
      %v1179 = vadd.f32 0.0, %v1178
      %v1180 = vpop.f32.mrf.mxu0
      %1181 = vmatprep.mubr.f32.mxu0 0.0
      %1182 = vmatmul.mubr.f32.gmra.mxu0 %v1099
      %v1183 = vpop.f32.mrf.mxu0
      %v1184 = vadd.f32 0.0, %v1183
      %v1185 = vpop.f32.mrf.mxu0
      %1186 = vmatprep.mubr.f32.mxu0 0.0
      %1187 = vmatmul.mubr.f32.gmra.mxu0 %v1102
      %v1188 = vpop.f32.mrf.mxu0
      %v1189 = vadd.f32 0.0, %v1188
      %v1190 = vpop.f32.mrf.mxu0
      %1191 = vdwg.mxu0
      %v1192 = vadd.f32 %v1082, %v1174
      %v1193 = vadd.f32 %v1083, %v1179
      %v1194 = vadd.f32 %v1084, %v1184
      %v1195 = vadd.f32 %v1085, %v1189
      %v1196 = vld [vmem:[%s2] sm:$0x1]
      %v1198 = vlaneseq
      %v1199 = vshrl.u32 %v1198, 7
      %v1200 = vsub.s32 0, %v1199
      %v1201 = vrot.slane %v1196, %v1200
      %v1203 = vadd.f32 %v1192, %v1201
      %v1204 = vadd.f32 %v1193, %v1201
      %v1205 = vadd.f32 %v1194, %v1201
      %v1206 = vadd.f32 %v1195, %v1201
      %1207 = vst.msk [vmem:[%s206] sm:$0xff] %vm220, %v1203
      %1208 = vst.msk [vmem:[%s206 + $0x8] sm:$0xff] %vm220, %v1204
      %1209 = vst.msk [vmem:[%s206 + $0x10] sm:$0xff] %vm220, %v1205
      %1210 = vst.msk [vmem:[%s206 + $0x18] sm:$0xff] %vm220, %v1206
      %s1211 = smul.u32 4, %s19
      %p1212 = scmp.lt.s32.totalorder %s18, 1
      %s1213 = scalar_select %p1212, %s18, 1
      %p1214 = scmp.lt.s32.totalorder %s1211, 7
      %s1215 = scalar_select %p1214, %s1211, 7
      %s1216 = smul.addr %s1213, 8
      %s1217 = sadd.s32 %s1215, %s1216
      %s1218 = smul.addr %s1217, 8
      %s1219 = scalar_lea.vmem %s3, %s1218
      // Predicated region
      $region33: #{tpu_custom_call.1} parent=31 // pred_check
        %p1220 = pneg %p116
      $region34: #{tpu_custom_call.1} parent=31 // pred_check_branch
        %1222 = sbr.rel (%p1220) target = $region36
      $region35: #{tpu_custom_call.1} parent=31 // pred_region
        %s1223 = smul.u32 4, %s19
      $region36: #{tpu_custom_call.1} parent=31 // pred_fallthru
        _
    $region32: #{tpu_custom_call.1} parent=5 // pred_fallthru
      _
    %p1224 = scmp.le.s32.totalorder 2, %s9
    // Predicated region
    $region37: #{tpu_custom_call.1} parent=5 // pred_check
      %p1225 = pneg %p1224
    $region38: #{tpu_custom_call.1} parent=5 // pred_check_branch
      %1227 = sbr.rel (%p1225) target = $region40
    $region39: #{tpu_custom_call.1} parent=5 // pred_region
      %s1228 = ssub.s32 %s9, 2
      // Predicated region
      $region41: #{tpu_custom_call.1} parent=39 // pred_check
        %p1229 = pneg %p122
      $region42: #{tpu_custom_call.1} parent=39 // pred_check_branch
        %1231 = sbr.rel (%p1229) target = $region44
      $region43: #{tpu_custom_call.1} parent=39 // pred_region
        %s1232 = smul.u32 4, %s21
        %p1233 = scmp.lt.s32.totalorder %s20, 1
        %s1234 = scalar_select %p1233, %s20, 1
        %p1235 = scmp.lt.s32.totalorder %s1232, 7
        %s1236 = scalar_select %p1235, %s1232, 7
        %s1237 = smul.addr %s1234, 8
        %s1238 = sadd.s32 %s1236, %s1237
        %s1239 = smul.addr %s1238, 8
        %s1240 = scalar_lea.vmem %s3, %s1239
      $region44: #{tpu_custom_call.1} parent=39 // pred_fallthru
        _
    $region40: #{tpu_custom_call.1} parent=5 // pred_fallthru
      _
  $region6: #{tpu_custom_call.1} parent=0 // loop_footer
    %s13 = sadd.s32 1, %s9
  $region7: #{tpu_custom_call.1} parent=0 // loop_footer_branch
    %8 = sbr.rel target = $region3
  $region8: #{tpu_custom_call.1} parent=0 // loop_exit
    _

</llo_original>
